<compile_context>
chip_gen: v7x
topology: tpu7x:2x2x1
jax: 0.10.0
libtpu: 0.0.40
codegen_flags: <defaults>
</compile_context>

<pallas_src>
import numpy as np
import jax
import jax.numpy as jnp
from jax import lax
from jax.experimental import pallas as pl
from jax.experimental.pallas import tpu as pltpu

MASTER_CONFIG = dict(vocab_size=64, d_model=32, n_heads=4,
                     context_window=8, batch_size=2)

LANE = 128


# ----------------------------- Pallas kernel -------------------------------
def llama_kernel(x_ref, scale_ref, wqkv_ref, cos_ref, sina_ref, sinb_ref,
                 wo_ref, bo_ref, w1_ref, b1_ref, wgl_ref, bgl_ref,
                 beta_ref, wlast_ref, blast_ref, out_ref):
    f32 = jnp.float32

    x = x_ref[0]                                  # (S, D) embedded tokens
    S, D = x.shape
    HD = cos_ref.shape[1]                         # H * D (fused head width)
    H = HD // D
    scale = scale_ref[...]                        # (1, D)

    def rmsnorm(v):
        ms = jnp.mean(v * v, axis=-1, keepdims=True)
        return v * lax.rsqrt(ms + 1e-8) * scale

    # ---- x = RMSNorm(embedding) ----
    xn = rmsnorm(x)

    # ---- fused QKV projection: one (S,D)x(D,3*H*D) matmul ----
    qkv = jnp.dot(xn, wqkv_ref[...], preferred_element_type=f32)   # (S, 3*HD)
    q = qkv[:, :HD]
    k = qkv[:, HD:2 * HD]
    v = qkv[:, 2 * HD:]

    # ---- RoPE via XLU lane rolls (no pair-swap matmul) ----
    # rope(t)[2i]   = t[2i]*cos + t[2i+1]*sin
    # rope(t)[2i+1] = t[2i+1]*cos - t[2i]*sin
    # sinA has +sin at even lanes (0 at odd); sinB has -sin at odd lanes.
    cosT = cos_ref[...]
    sinA = sina_ref[...]
    sinB = sinb_ref[...]

    def rope(t):
        up = pltpu.roll(t, shift=HD - 1, axis=1)   # up[d]   = t[(d+1) % HD]
        dn = pltpu.roll(t, shift=1, axis=1)        # dn[d]   = t[(d-1) % HD]
        return t * cosT + up * sinA + dn * sinB

    qr = rope(q)
    kr = rope(k)

    row = lax.broadcasted_iota(jnp.int32, (S, S), 0)
    col = lax.broadcasted_iota(jnp.int32, (S, S), 1)
    causal = col <= row
    inv_sqrt_d = 1.0 / (D ** 0.5)
    dn_contract = (((1,), (1,)), ((), ()))         # q @ k^T without transpose

    heads = []
    for h in range(H):                             # H=4, static unroll
        sl = slice(h * D, (h + 1) * D)
        s = lax.dot_general(qr[:, sl], kr[:, sl], dn_contract,
                            preferred_element_type=f32) * inv_sqrt_d
        s = jnp.where(causal, s, -1e30)
        m = jnp.max(s, axis=-1, keepdims=True)
        e = jnp.exp(s - m)
        p = e * pl.reciprocal(jnp.sum(e, axis=-1, keepdims=True), approx=True)
        heads.append(jnp.dot(p, v[:, sl], preferred_element_type=f32))
    hcat = jnp.concatenate(heads, axis=-1)         # (S, H*D) lane-dense
    attn = jnp.dot(hcat, wo_ref[...], preferred_element_type=f32) + bo_ref[...]
    # TODO(synk): nn.Dropout(0.1) in the multihead block is identity in eval mode; omitted.

    # ---- residual + second RMSNorm ----
    x = xn + attn
    xn = rmsnorm(x)

    # ---- Sequential(Linear(D,D), SwiGLU(D)) with residual ----
    y1 = jnp.dot(xn, w1_ref[...], preferred_element_type=f32) + b1_ref[...]
    gl = jnp.dot(y1, wgl_ref[...], preferred_element_type=f32) + bgl_ref[...]   # (S, 2D)
    gate = gl[:, :D]
    lin = gl[:, D:]
    swish_gate = gate * jax.nn.sigmoid(beta_ref[...] * gate)
    x = xn + swish_gate * lin

    # ---- final vocab projection (lane-padded to 128) ----
    out_ref[0] = jnp.dot(x, wlast_ref[...], preferred_element_type=f32) + blast_ref[...]


# ------------------------------- wrapper ------------------------------------
def llama_forward(idx, params, config):
    B, S = idx.shape
    V, D, H = config['vocab_size'], config['d_model'], config['n_heads']
    HD = H * D
    Vp = ((V + LANE - 1) // LANE) * LANE           # pad vocab to lane-dense 128

    # glue: embedding gather + weight fusion / padding (layout plumbing only)
    x_emb = jnp.take(params['emb'], idx, axis=0)   # (B, S, D)

    wqkv = jnp.concatenate([
        params['wq'].transpose(1, 0, 2).reshape(D, HD),
        params['wk'].transpose(1, 0, 2).reshape(D, HD),
        params['wv'].transpose(1, 0, 2).reshape(D, HD)], axis=1)     # (D, 3*HD)
    wo_flat = params['wo'].reshape(HD, D)
    wgl = jnp.concatenate([params['wg'], params['wl']], axis=1)      # (D, 2D)
    bgl = jnp.concatenate([params['bg'], params['bl']], axis=1)      # (1, 2D)
    wlast = jnp.pad(params['wlast'], ((0, 0), (0, Vp - V)))
    blast = jnp.pad(params['blast'], ((0, 0), (0, Vp - V)))

    def full(shape):
        return pl.BlockSpec(shape, lambda b, _n=len(shape): (0,) * _n)

    in_specs = [
        pl.BlockSpec((1, S, D), lambda b: (b, 0, 0)),   # embedded tokens
        full((1, D)),                                   # rms scale
        full((D, 3 * HD)),                              # fused QKV weight
        full((S, HD)), full((S, HD)), full((S, HD)),    # rope cos / sinA / sinB
        full((HD, D)), full((1, D)),                    # wo, bo
        full((D, D)), full((1, D)),                     # w1, b1
        full((D, 2 * D)), full((1, 2 * D)),             # fused [wg|wl], [bg|bl]
        full((1, 1)),                                   # beta
        full((D, Vp)), full((1, Vp)),                   # padded wlast, blast
    ]

    logits_p = pl.pallas_call(
        llama_kernel,
        out_shape=jax.ShapeDtypeStruct((B, S, Vp), jnp.float32),
        grid=(B,),
        in_specs=in_specs,
        out_specs=pl.BlockSpec((1, S, Vp), lambda b: (b, 0, 0)),
        compiler_params=pltpu.CompilerParams(dimension_semantics=("parallel",)),
    )(x_emb, params['rms_scale'], wqkv,
      params['rope_cos'], params['rope_sinA'], params['rope_sinB'],
      wo_flat, params['bo'], params['w1'], params['b1'], wgl, bgl,
      params['beta'], wlast, blast)

    return logits_p[..., :V]


# --------------------------- RoPE table helpers ------------------------------
def rope_tables(S, D, H):
    half = D // 2
    i = np.arange(half)
    theta = 10000.0 ** (-2.0 * (i - 1) / D)          # faithful to tutorial's (i-1)
    ang = np.arange(S)[:, None] * theta[None, :]     # (S, half)
    cos = np.repeat(np.cos(ang), 2, axis=1)          # (S, D)
    sinA = np.zeros((S, D), np.float64)
    sinB = np.zeros((S, D), np.float64)
    sinA[:, 0::2] = np.sin(ang)                      # multiplies t[d+1] at even d
    sinB[:, 1::2] = -np.sin(ang)                     # multiplies t[d-1] at odd d
    tile = lambda t: jnp.asarray(np.tile(t.astype(np.float32), (1, H)))
    return tile(cos), tile(sinA), tile(sinB)


def rope_matrices(S, D):  # full (S, D, D) rotation matrices, for the reference only
    R = np.zeros((S, D, D), np.float32)
    for m in range(S):
        for i in range(D // 2):
            th = 10000.0 ** (-2.0 * (i - 1) / D)
            a = m * th
            R[m, 2 * i, 2 * i] = np.cos(a)
            R[m, 2 * i, 2 * i + 1] = -np.sin(a)
            R[m, 2 * i + 1, 2 * i] = np.sin(a)
            R[m, 2 * i + 1, 2 * i + 1] = np.cos(a)
    return jnp.asarray(R)


# ------------------------- pure-JAX reference --------------------------------
def reference_forward(idx, params, config, R):
    D, H = config['d_model'], config['n_heads']

    def rmsnorm(v):
        ms = jnp.mean(v * v, axis=-1, keepdims=True)
        return v * lax.rsqrt(ms + 1e-8) * params['rms_scale'][0]

    x = params['emb'][idx]                                          # (B, S, D)
    xn = rmsnorm(x)
    B, S, _ = xn.shape
    mask = jnp.tril(jnp.ones((S, S), bool))

    heads = []
    for h in range(H):
        q = xn @ params['wq'][h]
        k = xn @ params['wk'][h]
        v = xn @ params['wv'][h]
        qr = jnp.einsum('bmd,mde->bme', q, R)
        kr = jnp.einsum('bmd,mde->bme', k, R)
        s = jnp.einsum('bqd,bkd->bqk', qr, kr) / (D ** 0.5)
        s = jnp.where(mask[None], s, -1e30)
        p = jax.nn.softmax(s, axis=-1)
        heads.append(jnp.einsum('bqk,bkd->bqd', p, v))
    hcat = jnp.concatenate(heads, axis=-1)                          # (B, S, H*D)
    attn = hcat @ params['wo'].reshape(H * D, D) + params['bo'][0]

    x = xn + attn
    xn = rmsnorm(x)
    y1 = xn @ params['w1'] + params['b1'][0]
    gate = y1 @ params['wg'] + params['bg'][0]
    swish = gate * jax.nn.sigmoid(params['beta'][0, 0] * gate)
    lin = y1 @ params['wl'] + params['bl'][0]
    x = xn + swish * lin
    return x @ params['wlast'] + params['blast'][0]


# ---------------------------------- main -------------------------------------
if __name__ == "__main__":
    cfg = MASTER_CONFIG
    B, S = cfg['batch_size'], cfg['context_window']
    V, D, H = cfg['vocab_size'], cfg['d_model'], cfg['n_heads']

    key = jax.random.PRNGKey(0)
    ks = jax.random.split(key, 16)

    def init(k, shape, s=0.1):
        return jax.random.normal(k, shape, jnp.float32) * s

    cosT, sinA, sinB = rope_tables(S, D, H)
    params = {
        'emb': init(ks[0], (V, D)),
        'rms_scale': jnp.ones((1, D), jnp.float32),
        'wq': init(ks[1], (H, D, D)),
        'wk': init(ks[2], (H, D, D)),
        'wv': init(ks[3], (H, D, D)),
        'wo': init(ks[4], (H, D, D)),
        'bo': init(ks[5], (1, D), 0.01),
        'w1': init(ks[6], (D, D)),
        'b1': init(ks[7], (1, D), 0.01),
        'wg': init(ks[8], (D, D)),
        'bg': init(ks[9], (1, D), 0.01),
        'wl': init(ks[10], (D, D)),
        'bl': init(ks[11], (1, D), 0.01),
        'beta': jnp.ones((1, 1), jnp.float32),
        'wlast': init(ks[12], (D, V)),
        'blast': init(ks[13], (1, V), 0.01),
        'rope_cos': cosT, 'rope_sinA': sinA, 'rope_sinB': sinB,
    }
    idx = jax.random.randint(ks[14], (B, S), 0, V, dtype=jnp.int32)

    logits = llama_forward(idx, params, cfg)
    logits = jax.block_until_ready(logits)

    assert logits.shape == (B, S, V), logits.shape
    assert bool(jnp.all(jnp.isfinite(logits)))

    ref = reference_forward(idx, params, cfg, rope_matrices(S, D))
    if not np.allclose(np.asarray(logits), np.asarray(ref), atol=2e-2, rtol=2e-2):
        raise AssertionError("Pallas kernel disagrees with JAX reference; "
                             f"max |diff| = {float(jnp.max(jnp.abs(logits - ref)))}")

    print("KERNEL_OK")
</pallas_src>

<mosaic_0001>
module attributes {stable_mosaic.version = 11 : i64} {
  func.func @llama_kernel(%arg0: i32, %arg1: memref<1x8x32xf32, #tpu.memory_space<vmem>>, %arg2: memref<1x32xf32, #tpu.memory_space<vmem>>, %arg3: memref<32x384xf32, #tpu.memory_space<vmem>>, %arg4: memref<8x128xf32, #tpu.memory_space<vmem>>, %arg5: memref<8x128xf32, #tpu.memory_space<vmem>>, %arg6: memref<8x128xf32, #tpu.memory_space<vmem>>, %arg7: memref<128x32xf32, #tpu.memory_space<vmem>>, %arg8: memref<1x32xf32, #tpu.memory_space<vmem>>, %arg9: memref<32x32xf32, #tpu.memory_space<vmem>>, %arg10: memref<1x32xf32, #tpu.memory_space<vmem>>, %arg11: memref<32x64xf32, #tpu.memory_space<vmem>>, %arg12: memref<1x64xf32, #tpu.memory_space<vmem>>, %arg13: memref<1x1xf32, #tpu.memory_space<vmem>>, %arg14: memref<32x128xf32, #tpu.memory_space<vmem>>, %arg15: memref<1x128xf32, #tpu.memory_space<vmem>>, %arg16: memref<1x8x128xf32, #tpu.memory_space<vmem>>) attributes {dimension_semantics = [#tpu.dimension_semantics<parallel>], iteration_bounds = array<i64: 2>, scalar_prefetch = 0 : i64, scratch_operands = 0 : i64, tpu.core_type = #tpu.core_type<tc>, window_params = [{transform_indices = @transform_0, window_bounds = array<i64: 1, 8, 32>}, {pipeline_mode = #tpu.pipeline_mode<synchronous>, transform_indices = @transform_1, window_bounds = array<i64: 1, 32>}, {pipeline_mode = #tpu.pipeline_mode<synchronous>, transform_indices = @transform_2, window_bounds = array<i64: 32, 384>}, {pipeline_mode = #tpu.pipeline_mode<synchronous>, transform_indices = @transform_3, window_bounds = array<i64: 8, 128>}, {pipeline_mode = #tpu.pipeline_mode<synchronous>, transform_indices = @transform_4, window_bounds = array<i64: 8, 128>}, {pipeline_mode = #tpu.pipeline_mode<synchronous>, transform_indices = @transform_5, window_bounds = array<i64: 8, 128>}, {pipeline_mode = #tpu.pipeline_mode<synchronous>, transform_indices = @transform_6, window_bounds = array<i64: 128, 32>}, {pipeline_mode = #tpu.pipeline_mode<synchronous>, transform_indices = @transform_7, window_bounds = array<i64: 1, 32>}, {pipeline_mode = #tpu.pipeline_mode<synchronous>, transform_indices = @transform_8, window_bounds = array<i64: 32, 32>}, {pipeline_mode = #tpu.pipeline_mode<synchronous>, transform_indices = @transform_9, window_bounds = array<i64: 1, 32>}, {pipeline_mode = #tpu.pipeline_mode<synchronous>, transform_indices = @transform_10, window_bounds = array<i64: 32, 64>}, {pipeline_mode = #tpu.pipeline_mode<synchronous>, transform_indices = @transform_11, window_bounds = array<i64: 1, 64>}, {pipeline_mode = #tpu.pipeline_mode<synchronous>, transform_indices = @transform_12, window_bounds = array<i64: 1, 1>}, {pipeline_mode = #tpu.pipeline_mode<synchronous>, transform_indices = @transform_13, window_bounds = array<i64: 32, 128>}, {pipeline_mode = #tpu.pipeline_mode<synchronous>, transform_indices = @transform_14, window_bounds = array<i64: 1, 128>}, {transform_indices = @transform_15, window_bounds = array<i64: 1, 8, 128>}]} {
    %c0 = arith.constant 0 : index
    %c0_0 = arith.constant 0 : index
    %c0_1 = arith.constant 0 : index
    %0 = vector.load %arg1[%c0, %c0_0, %c0_1] : memref<1x8x32xf32, #tpu.memory_space<vmem>>, vector<1x8x32xf32>
    %1 = vector.shape_cast %0 : vector<1x8x32xf32> to vector<8x32xf32>
    %c0_2 = arith.constant 0 : index
    %c0_3 = arith.constant 0 : index
    %2 = vector.load %arg2[%c0_2, %c0_3] : memref<1x32xf32, #tpu.memory_space<vmem>>, vector<1x32xf32>
    %3 = arith.mulf %1, %1 : vector<8x32xf32>
    %cst = arith.constant dense<0.000000e+00> : vector<8xf32>
    %4 = vector.multi_reduction <add>, %3, %cst [1] : vector<8x32xf32> to vector<8xf32>
    %5 = vector.shape_cast %4 : vector<8xf32> to vector<8x1xf32>
    %cst_4 = arith.constant 3.200000e+01 : f32
    %6 = vector.broadcast %cst_4 : f32 to vector<8x1xf32>
    %7 = arith.divf %5, %6 : vector<8x1xf32>
    %cst_5 = arith.constant 9.99999993E-9 : f32
    %8 = vector.broadcast %cst_5 : f32 to vector<8x1xf32>
    %9 = arith.addf %7, %8 : vector<8x1xf32>
    %10 = math.rsqrt %9 : vector<8x1xf32>
    %11 = vector.broadcast %10 : vector<8x1xf32> to vector<8x32xf32>
    %12 = arith.mulf %1, %11 : vector<8x32xf32>
    %13 = vector.broadcast %2 : vector<1x32xf32> to vector<8x32xf32>
    %14 = arith.mulf %12, %13 : vector<8x32xf32>
    %c0_6 = arith.constant 0 : index
    %c0_7 = arith.constant 0 : index
    %15 = vector.load %arg3[%c0_6, %c0_7] : memref<32x384xf32, #tpu.memory_space<vmem>>, vector<32x384xf32>
    %cst_8 = arith.constant dense<0.000000e+00> : vector<8x384xf32>
    %16 = tpu.matmul %14, %15, %cst_8 {dimension_numbers = #tpu.dot_dimension_numbers<[1], [0], [0], [1], [0, 0, 1, 1], [], []>} : vector<8x32xf32>, vector<32x384xf32>, vector<8x384xf32> -> vector<8x384xf32>
    %17 = vector.extract_strided_slice %16 {offsets = [0, 0], sizes = [8, 128], strides = [1, 1]} : vector<8x384xf32> to vector<8x128xf32>
    %18 = vector.extract_strided_slice %16 {offsets = [0, 128], sizes = [8, 128], strides = [1, 1]} : vector<8x384xf32> to vector<8x128xf32>
    %19 = vector.extract_strided_slice %16 {offsets = [0, 256], sizes = [8, 128], strides = [1, 1]} : vector<8x384xf32> to vector<8x128xf32>
    %c0_9 = arith.constant 0 : index
    %c0_10 = arith.constant 0 : index
    %20 = vector.load %arg4[%c0_9, %c0_10] : memref<8x128xf32, #tpu.memory_space<vmem>>, vector<8x128xf32>
    %c0_11 = arith.constant 0 : index
    %c0_12 = arith.constant 0 : index
    %21 = vector.load %arg5[%c0_11, %c0_12] : memref<8x128xf32, #tpu.memory_space<vmem>>, vector<8x128xf32>
    %c0_13 = arith.constant 0 : index
    %c0_14 = arith.constant 0 : index
    %22 = vector.load %arg6[%c0_13, %c0_14] : memref<8x128xf32, #tpu.memory_space<vmem>>, vector<8x128xf32>
    %c127_i32 = arith.constant 127 : i32
    %23 = tpu.dynamic_rotate %17 by %c127_i32 dim 1 : vector<8x128xf32>, i32 -> vector<8x128xf32>
    %c1_i32 = arith.constant 1 : i32
    %24 = tpu.dynamic_rotate %17 by %c1_i32 dim 1 : vector<8x128xf32>, i32 -> vector<8x128xf32>
    %25 = arith.mulf %17, %20 : vector<8x128xf32>
    %26 = arith.mulf %23, %21 : vector<8x128xf32>
    %27 = arith.addf %25, %26 : vector<8x128xf32>
    %28 = arith.mulf %24, %22 : vector<8x128xf32>
    %29 = arith.addf %27, %28 : vector<8x128xf32>
    %c127_i32_15 = arith.constant 127 : i32
    %30 = tpu.dynamic_rotate %18 by %c127_i32_15 dim 1 : vector<8x128xf32>, i32 -> vector<8x128xf32>
    %c1_i32_16 = arith.constant 1 : i32
    %31 = tpu.dynamic_rotate %18 by %c1_i32_16 dim 1 : vector<8x128xf32>, i32 -> vector<8x128xf32>
    %32 = arith.mulf %18, %20 : vector<8x128xf32>
    %33 = arith.mulf %30, %21 : vector<8x128xf32>
    %34 = arith.addf %32, %33 : vector<8x128xf32>
    %35 = arith.mulf %31, %22 : vector<8x128xf32>
    %36 = arith.addf %34, %35 : vector<8x128xf32>
    %37 = tpu.iota {dimensions = array<i32: 0>} : vector<8x8xi32>
    %38 = tpu.iota {dimensions = array<i32: 1>} : vector<8x8xi32>
    %39 = arith.cmpi sle, %38, %37 : vector<8x8xi32>
    %40 = vector.extract_strided_slice %29 {offsets = [0, 0], sizes = [8, 32], strides = [1, 1]} : vector<8x128xf32> to vector<8x32xf32>
    %41 = vector.extract_strided_slice %36 {offsets = [0, 0], sizes = [8, 32], strides = [1, 1]} : vector<8x128xf32> to vector<8x32xf32>
    %cst_17 = arith.constant dense<0.000000e+00> : vector<8x8xf32>
    %42 = tpu.matmul %40, %41, %cst_17 {dimension_numbers = #tpu.dot_dimension_numbers<[1], [1], [0], [0], [0, 0, 1, 0], [], []>} : vector<8x32xf32>, vector<8x32xf32>, vector<8x8xf32> -> vector<8x8xf32>
    %cst_18 = arith.constant 0.176776692 : f32
    %43 = vector.broadcast %cst_18 : f32 to vector<8x8xf32>
    %44 = arith.mulf %42, %43 : vector<8x8xf32>
    %cst_19 = arith.constant -1.000000e+30 : f32
    %45 = vector.broadcast %cst_19 : f32 to vector<8x8xf32>
    %46 = arith.select %39, %44, %45 : vector<8x8xi1>, vector<8x8xf32>
    %cst_20 = arith.constant dense<0xFF800000> : vector<8xf32>
    %47 = vector.multi_reduction <maximumf>, %46, %cst_20 [1] : vector<8x8xf32> to vector<8xf32>
    %48 = vector.shape_cast %47 : vector<8xf32> to vector<8x1xf32>
    %49 = vector.broadcast %48 : vector<8x1xf32> to vector<8x8xf32>
    %50 = arith.subf %46, %49 : vector<8x8xf32>
    %51 = math.exp %50 : vector<8x8xf32>
    %cst_21 = arith.constant dense<0.000000e+00> : vector<8xf32>
    %52 = vector.multi_reduction <add>, %51, %cst_21 [1] : vector<8x8xf32> to vector<8xf32>
    %53 = vector.shape_cast %52 : vector<8xf32> to vector<8x1xf32>
    %54 = tpu.reciprocal %53 {approx = true} : vector<8x1xf32> -> vector<8x1xf32>
    %55 = vector.broadcast %54 : vector<8x1xf32> to vector<8x8xf32>
    %56 = arith.mulf %51, %55 : vector<8x8xf32>
    %57 = vector.extract_strided_slice %19 {offsets = [0, 0], sizes = [8, 32], strides = [1, 1]} : vector<8x128xf32> to vector<8x32xf32>
    %cst_22 = arith.constant dense<0.000000e+00> : vector<8x32xf32>
    %58 = tpu.matmul %56, %57, %cst_22 {dimension_numbers = #tpu.dot_dimension_numbers<[1], [0], [0], [1], [0, 0, 1, 1], [], []>} : vector<8x8xf32>, vector<8x32xf32>, vector<8x32xf32> -> vector<8x32xf32>
    %59 = vector.extract_strided_slice %29 {offsets = [0, 32], sizes = [8, 32], strides = [1, 1]} : vector<8x128xf32> to vector<8x32xf32>
    %60 = vector.extract_strided_slice %36 {offsets = [0, 32], sizes = [8, 32], strides = [1, 1]} : vector<8x128xf32> to vector<8x32xf32>
    %cst_23 = arith.constant dense<0.000000e+00> : vector<8x8xf32>
    %61 = tpu.matmul %59, %60, %cst_23 {dimension_numbers = #tpu.dot_dimension_numbers<[1], [1], [0], [0], [0, 0, 1, 0], [], []>} : vector<8x32xf32>, vector<8x32xf32>, vector<8x8xf32> -> vector<8x8xf32>
    %cst_24 = arith.constant 0.176776692 : f32
    %62 = vector.broadcast %cst_24 : f32 to vector<8x8xf32>
    %63 = arith.mulf %61, %62 : vector<8x8xf32>
    %cst_25 = arith.constant -1.000000e+30 : f32
    %64 = vector.broadcast %cst_25 : f32 to vector<8x8xf32>
    %65 = arith.select %39, %63, %64 : vector<8x8xi1>, vector<8x8xf32>
    %cst_26 = arith.constant dense<0xFF800000> : vector<8xf32>
    %66 = vector.multi_reduction <maximumf>, %65, %cst_26 [1] : vector<8x8xf32> to vector<8xf32>
    %67 = vector.shape_cast %66 : vector<8xf32> to vector<8x1xf32>
    %68 = vector.broadcast %67 : vector<8x1xf32> to vector<8x8xf32>
    %69 = arith.subf %65, %68 : vector<8x8xf32>
    %70 = math.exp %69 : vector<8x8xf32>
    %cst_27 = arith.constant dense<0.000000e+00> : vector<8xf32>
    %71 = vector.multi_reduction <add>, %70, %cst_27 [1] : vector<8x8xf32> to vector<8xf32>
    %72 = vector.shape_cast %71 : vector<8xf32> to vector<8x1xf32>
    %73 = tpu.reciprocal %72 {approx = true} : vector<8x1xf32> -> vector<8x1xf32>
    %74 = vector.broadcast %73 : vector<8x1xf32> to vector<8x8xf32>
    %75 = arith.mulf %70, %74 : vector<8x8xf32>
    %76 = vector.extract_strided_slice %19 {offsets = [0, 32], sizes = [8, 32], strides = [1, 1]} : vector<8x128xf32> to vector<8x32xf32>
    %cst_28 = arith.constant dense<0.000000e+00> : vector<8x32xf32>
    %77 = tpu.matmul %75, %76, %cst_28 {dimension_numbers = #tpu.dot_dimension_numbers<[1], [0], [0], [1], [0, 0, 1, 1], [], []>} : vector<8x8xf32>, vector<8x32xf32>, vector<8x32xf32> -> vector<8x32xf32>
    %78 = vector.extract_strided_slice %29 {offsets = [0, 64], sizes = [8, 32], strides = [1, 1]} : vector<8x128xf32> to vector<8x32xf32>
    %79 = vector.extract_strided_slice %36 {offsets = [0, 64], sizes = [8, 32], strides = [1, 1]} : vector<8x128xf32> to vector<8x32xf32>
    %cst_29 = arith.constant dense<0.000000e+00> : vector<8x8xf32>
    %80 = tpu.matmul %78, %79, %cst_29 {dimension_numbers = #tpu.dot_dimension_numbers<[1], [1], [0], [0], [0, 0, 1, 0], [], []>} : vector<8x32xf32>, vector<8x32xf32>, vector<8x8xf32> -> vector<8x8xf32>
    %cst_30 = arith.constant 0.176776692 : f32
    %81 = vector.broadcast %cst_30 : f32 to vector<8x8xf32>
    %82 = arith.mulf %80, %81 : vector<8x8xf32>
    %cst_31 = arith.constant -1.000000e+30 : f32
    %83 = vector.broadcast %cst_31 : f32 to vector<8x8xf32>
    %84 = arith.select %39, %82, %83 : vector<8x8xi1>, vector<8x8xf32>
    %cst_32 = arith.constant dense<0xFF800000> : vector<8xf32>
    %85 = vector.multi_reduction <maximumf>, %84, %cst_32 [1] : vector<8x8xf32> to vector<8xf32>
    %86 = vector.shape_cast %85 : vector<8xf32> to vector<8x1xf32>
    %87 = vector.broadcast %86 : vector<8x1xf32> to vector<8x8xf32>
    %88 = arith.subf %84, %87 : vector<8x8xf32>
    %89 = math.exp %88 : vector<8x8xf32>
    %cst_33 = arith.constant dense<0.000000e+00> : vector<8xf32>
    %90 = vector.multi_reduction <add>, %89, %cst_33 [1] : vector<8x8xf32> to vector<8xf32>
    %91 = vector.shape_cast %90 : vector<8xf32> to vector<8x1xf32>
    %92 = tpu.reciprocal %91 {approx = true} : vector<8x1xf32> -> vector<8x1xf32>
    %93 = vector.broadcast %92 : vector<8x1xf32> to vector<8x8xf32>
    %94 = arith.mulf %89, %93 : vector<8x8xf32>
    %95 = vector.extract_strided_slice %19 {offsets = [0, 64], sizes = [8, 32], strides = [1, 1]} : vector<8x128xf32> to vector<8x32xf32>
    %cst_34 = arith.constant dense<0.000000e+00> : vector<8x32xf32>
    %96 = tpu.matmul %94, %95, %cst_34 {dimension_numbers = #tpu.dot_dimension_numbers<[1], [0], [0], [1], [0, 0, 1, 1], [], []>} : vector<8x8xf32>, vector<8x32xf32>, vector<8x32xf32> -> vector<8x32xf32>
    %97 = vector.extract_strided_slice %29 {offsets = [0, 96], sizes = [8, 32], strides = [1, 1]} : vector<8x128xf32> to vector<8x32xf32>
    %98 = vector.extract_strided_slice %36 {offsets = [0, 96], sizes = [8, 32], strides = [1, 1]} : vector<8x128xf32> to vector<8x32xf32>
    %cst_35 = arith.constant dense<0.000000e+00> : vector<8x8xf32>
    %99 = tpu.matmul %97, %98, %cst_35 {dimension_numbers = #tpu.dot_dimension_numbers<[1], [1], [0], [0], [0, 0, 1, 0], [], []>} : vector<8x32xf32>, vector<8x32xf32>, vector<8x8xf32> -> vector<8x8xf32>
    %cst_36 = arith.constant 0.176776692 : f32
    %100 = vector.broadcast %cst_36 : f32 to vector<8x8xf32>
    %101 = arith.mulf %99, %100 : vector<8x8xf32>
    %cst_37 = arith.constant -1.000000e+30 : f32
    %102 = vector.broadcast %cst_37 : f32 to vector<8x8xf32>
    %103 = arith.select %39, %101, %102 : vector<8x8xi1>, vector<8x8xf32>
    %cst_38 = arith.constant dense<0xFF800000> : vector<8xf32>
    %104 = vector.multi_reduction <maximumf>, %103, %cst_38 [1] : vector<8x8xf32> to vector<8xf32>
    %105 = vector.shape_cast %104 : vector<8xf32> to vector<8x1xf32>
    %106 = vector.broadcast %105 : vector<8x1xf32> to vector<8x8xf32>
    %107 = arith.subf %103, %106 : vector<8x8xf32>
    %108 = math.exp %107 : vector<8x8xf32>
    %cst_39 = arith.constant dense<0.000000e+00> : vector<8xf32>
    %109 = vector.multi_reduction <add>, %108, %cst_39 [1] : vector<8x8xf32> to vector<8xf32>
    %110 = vector.shape_cast %109 : vector<8xf32> to vector<8x1xf32>
    %111 = tpu.reciprocal %110 {approx = true} : vector<8x1xf32> -> vector<8x1xf32>
    %112 = vector.broadcast %111 : vector<8x1xf32> to vector<8x8xf32>
    %113 = arith.mulf %108, %112 : vector<8x8xf32>
    %114 = vector.extract_strided_slice %19 {offsets = [0, 96], sizes = [8, 32], strides = [1, 1]} : vector<8x128xf32> to vector<8x32xf32>
    %cst_40 = arith.constant dense<0.000000e+00> : vector<8x32xf32>
    %115 = tpu.matmul %113, %114, %cst_40 {dimension_numbers = #tpu.dot_dimension_numbers<[1], [0], [0], [1], [0, 0, 1, 1], [], []>} : vector<8x8xf32>, vector<8x32xf32>, vector<8x32xf32> -> vector<8x32xf32>
    %116 = tpu.concatenate %58, %77, %96, %115 in 1 : vector<8x32xf32>, vector<8x32xf32>, vector<8x32xf32>, vector<8x32xf32> -> vector<8x128xf32>
    %c0_41 = arith.constant 0 : index
    %c0_42 = arith.constant 0 : index
    %117 = vector.load %arg7[%c0_41, %c0_42] : memref<128x32xf32, #tpu.memory_space<vmem>>, vector<128x32xf32>
    %cst_43 = arith.constant dense<0.000000e+00> : vector<8x32xf32>
    %118 = tpu.matmul %116, %117, %cst_43 {dimension_numbers = #tpu.dot_dimension_numbers<[1], [0], [0], [1], [0, 0, 1, 1], [], []>} : vector<8x128xf32>, vector<128x32xf32>, vector<8x32xf32> -> vector<8x32xf32>
    %c0_44 = arith.constant 0 : index
    %c0_45 = arith.constant 0 : index
    %119 = vector.load %arg8[%c0_44, %c0_45] : memref<1x32xf32, #tpu.memory_space<vmem>>, vector<1x32xf32>
    %120 = vector.broadcast %119 : vector<1x32xf32> to vector<8x32xf32>
    %121 = arith.addf %118, %120 : vector<8x32xf32>
    %122 = arith.addf %14, %121 : vector<8x32xf32>
    %123 = arith.mulf %122, %122 : vector<8x32xf32>
    %cst_46 = arith.constant dense<0.000000e+00> : vector<8xf32>
    %124 = vector.multi_reduction <add>, %123, %cst_46 [1] : vector<8x32xf32> to vector<8xf32>
    %125 = vector.shape_cast %124 : vector<8xf32> to vector<8x1xf32>
    %cst_47 = arith.constant 3.200000e+01 : f32
    %126 = vector.broadcast %cst_47 : f32 to vector<8x1xf32>
    %127 = arith.divf %125, %126 : vector<8x1xf32>
    %cst_48 = arith.constant 9.99999993E-9 : f32
    %128 = vector.broadcast %cst_48 : f32 to vector<8x1xf32>
    %129 = arith.addf %127, %128 : vector<8x1xf32>
    %130 = math.rsqrt %129 : vector<8x1xf32>
    %131 = vector.broadcast %130 : vector<8x1xf32> to vector<8x32xf32>
    %132 = arith.mulf %122, %131 : vector<8x32xf32>
    %133 = vector.broadcast %2 : vector<1x32xf32> to vector<8x32xf32>
    %134 = arith.mulf %132, %133 : vector<8x32xf32>
    %c0_49 = arith.constant 0 : index
    %c0_50 = arith.constant 0 : index
    %135 = vector.load %arg9[%c0_49, %c0_50] : memref<32x32xf32, #tpu.memory_space<vmem>>, vector<32x32xf32>
    %cst_51 = arith.constant dense<0.000000e+00> : vector<8x32xf32>
    %136 = tpu.matmul %134, %135, %cst_51 {dimension_numbers = #tpu.dot_dimension_numbers<[1], [0], [0], [1], [0, 0, 1, 1], [], []>} : vector<8x32xf32>, vector<32x32xf32>, vector<8x32xf32> -> vector<8x32xf32>
    %c0_52 = arith.constant 0 : index
    %c0_53 = arith.constant 0 : index
    %137 = vector.load %arg10[%c0_52, %c0_53] : memref<1x32xf32, #tpu.memory_space<vmem>>, vector<1x32xf32>
    %138 = vector.broadcast %137 : vector<1x32xf32> to vector<8x32xf32>
    %139 = arith.addf %136, %138 : vector<8x32xf32>
    %c0_54 = arith.constant 0 : index
    %c0_55 = arith.constant 0 : index
    %140 = vector.load %arg11[%c0_54, %c0_55] : memref<32x64xf32, #tpu.memory_space<vmem>>, vector<32x64xf32>
    %cst_56 = arith.constant dense<0.000000e+00> : vector<8x64xf32>
    %141 = tpu.matmul %139, %140, %cst_56 {dimension_numbers = #tpu.dot_dimension_numbers<[1], [0], [0], [1], [0, 0, 1, 1], [], []>} : vector<8x32xf32>, vector<32x64xf32>, vector<8x64xf32> -> vector<8x64xf32>
    %c0_57 = arith.constant 0 : index
    %c0_58 = arith.constant 0 : index
    %142 = vector.load %arg12[%c0_57, %c0_58] : memref<1x64xf32, #tpu.memory_space<vmem>>, vector<1x64xf32>
    %143 = vector.broadcast %142 : vector<1x64xf32> to vector<8x64xf32>
    %144 = arith.addf %141, %143 : vector<8x64xf32>
    %145 = vector.extract_strided_slice %144 {offsets = [0, 0], sizes = [8, 32], strides = [1, 1]} : vector<8x64xf32> to vector<8x32xf32>
    %146 = vector.extract_strided_slice %144 {offsets = [0, 32], sizes = [8, 32], strides = [1, 1]} : vector<8x64xf32> to vector<8x32xf32>
    %c0_59 = arith.constant 0 : index
    %c0_60 = arith.constant 0 : index
    %147 = vector.load %arg13[%c0_59, %c0_60] : memref<1x1xf32, #tpu.memory_space<vmem>>, vector<1x1xf32>
    %148 = vector.broadcast %147 : vector<1x1xf32> to vector<8x32xf32>
    %149 = arith.mulf %148, %145 : vector<8x32xf32>
    %150 = arith.negf %149 : vector<8x32xf32>
    %151 = math.exp %150 : vector<8x32xf32>
    %cst_61 = arith.constant 1.000000e+00 : f32
    %152 = vector.broadcast %cst_61 : f32 to vector<8x32xf32>
    %153 = arith.addf %152, %151 : vector<8x32xf32>
    %154 = arith.divf %152, %153 : vector<8x32xf32>
    %155 = arith.mulf %145, %154 : vector<8x32xf32>
    %156 = arith.mulf %155, %146 : vector<8x32xf32>
    %157 = arith.addf %134, %156 : vector<8x32xf32>
    %c0_62 = arith.constant 0 : index
    %c0_63 = arith.constant 0 : index
    %158 = vector.load %arg14[%c0_62, %c0_63] : memref<32x128xf32, #tpu.memory_space<vmem>>, vector<32x128xf32>
    %cst_64 = arith.constant dense<0.000000e+00> : vector<8x128xf32>
    %159 = tpu.matmul %157, %158, %cst_64 {dimension_numbers = #tpu.dot_dimension_numbers<[1], [0], [0], [1], [0, 0, 1, 1], [], []>} : vector<8x32xf32>, vector<32x128xf32>, vector<8x128xf32> -> vector<8x128xf32>
    %c0_65 = arith.constant 0 : index
    %c0_66 = arith.constant 0 : index
    %160 = vector.load %arg15[%c0_65, %c0_66] : memref<1x128xf32, #tpu.memory_space<vmem>>, vector<1x128xf32>
    %161 = vector.broadcast %160 : vector<1x128xf32> to vector<8x128xf32>
    %162 = arith.addf %159, %161 : vector<8x128xf32>
    %c0_67 = arith.constant 0 : index
    %c0_68 = arith.constant 0 : index
    %c0_69 = arith.constant 0 : index
    %163 = vector.load %arg16[%c0_67, %c0_68, %c0_69] : memref<1x8x128xf32, #tpu.memory_space<vmem>>, vector<1x8x128xf32>
    %164 = vector.shape_cast %163 : vector<1x8x128xf32> to vector<8x128xf32>
    %165 = vector.shape_cast %162 : vector<8x128xf32> to vector<1x8x128xf32>
    tpu.vector_store %arg16[%c0_67, %c0_68, %c0_69], %165 {strides = array<i32>} : memref<1x8x128xf32, #tpu.memory_space<vmem>>, vector<1x8x128xf32>,
    return
  }
  func.func @transform_0(%arg0: i32) -> (i32, i32, i32) {
    %c0_i32 = arith.constant 0 : i32
    %c0_i32_0 = arith.constant 0 : i32
    %c0_i32_1 = arith.constant 0 : i32
    return %arg0, %c0_i32, %c0_i32_0 : i32, i32, i32
  }
  func.func @transform_1(%arg0: i32) -> (i32, i32) {
    %c0_i32 = arith.constant 0 : i32
    %c0_i32_0 = arith.constant 0 : i32
    %c0_i32_1 = arith.constant 0 : i32
    return %c0_i32, %c0_i32_0 : i32, i32
  }
  func.func @transform_2(%arg0: i32) -> (i32, i32) {
    %c0_i32 = arith.constant 0 : i32
    %c0_i32_0 = arith.constant 0 : i32
    %c0_i32_1 = arith.constant 0 : i32
    return %c0_i32, %c0_i32_0 : i32, i32
  }
  func.func @transform_3(%arg0: i32) -> (i32, i32) {
    %c0_i32 = arith.constant 0 : i32
    %c0_i32_0 = arith.constant 0 : i32
    %c0_i32_1 = arith.constant 0 : i32
    return %c0_i32, %c0_i32_0 : i32, i32
  }
  func.func @transform_4(%arg0: i32) -> (i32, i32) {
    %c0_i32 = arith.constant 0 : i32
    %c0_i32_0 = arith.constant 0 : i32
    %c0_i32_1 = arith.constant 0 : i32
    return %c0_i32, %c0_i32_0 : i32, i32
  }
  func.func @transform_5(%arg0: i32) -> (i32, i32) {
    %c0_i32 = arith.constant 0 : i32
    %c0_i32_0 = arith.constant 0 : i32
    %c0_i32_1 = arith.constant 0 : i32
    return %c0_i32, %c0_i32_0 : i32, i32
  }
  func.func @transform_6(%arg0: i32) -> (i32, i32) {
    %c0_i32 = arith.constant 0 : i32
    %c0_i32_0 = arith.constant 0 : i32
    %c0_i32_1 = arith.constant 0 : i32
    return %c0_i32, %c0_i32_0 : i32, i32
  }
  func.func @transform_7(%arg0: i32) -> (i32, i32) {
    %c0_i32 = arith.constant 0 : i32
    %c0_i32_0 = arith.constant 0 : i32
    %c0_i32_1 = arith.constant 0 : i32
    return %c0_i32, %c0_i32_0 : i32, i32
  }
  func.func @transform_8(%arg0: i32) -> (i32, i32) {
    %c0_i32 = arith.constant 0 : i32
    %c0_i32_0 = arith.constant 0 : i32
    %c0_i32_1 = arith.constant 0 : i32
    return %c0_i32, %c0_i32_0 : i32, i32
  }
  func.func @transform_9(%arg0: i32) -> (i32, i32) {
    %c0_i32 = arith.constant 0 : i32
    %c0_i32_0 = arith.constant 0 : i32
    %c0_i32_1 = arith.constant 0 : i32
    return %c0_i32, %c0_i32_0 : i32, i32
  }
  func.func @transform_10(%arg0: i32) -> (i32, i32) {
    %c0_i32 = arith.constant 0 : i32
    %c0_i32_0 = arith.constant 0 : i32
    %c0_i32_1 = arith.constant 0 : i32
    return %c0_i32, %c0_i32_0 : i32, i32
  }
  func.func @transform_11(%arg0: i32) -> (i32, i32) {
    %c0_i32 = arith.constant 0 : i32
    %c0_i32_0 = arith.constant 0 : i32
    %c0_i32_1 = arith.constant 0 : i32
    return %c0_i32, %c0_i32_0 : i32, i32
  }
  func.func @transform_12(%arg0: i32) -> (i32, i32) {
    %c0_i32 = arith.constant 0 : i32
    %c0_i32_0 = arith.constant 0 : i32
    %c0_i32_1 = arith.constant 0 : i32
    return %c0_i32, %c0_i32_0 : i32, i32
  }
  func.func @transform_13(%arg0: i32) -> (i32, i32) {
    %c0_i32 = arith.constant 0 : i32
    %c0_i32_0 = arith.constant 0 : i32
    %c0_i32_1 = arith.constant 0 : i32
    return %c0_i32, %c0_i32_0 : i32, i32
  }
  func.func @transform_14(%arg0: i32) -> (i32, i32) {
    %c0_i32 = arith.constant 0 : i32
    %c0_i32_0 = arith.constant 0 : i32
    %c0_i32_1 = arith.constant 0 : i32
    return %c0_i32, %c0_i32_0 : i32, i32
  }
  func.func @transform_15(%arg0: i32) -> (i32, i32, i32) {
    %c0_i32 = arith.constant 0 : i32
    %c0_i32_0 = arith.constant 0 : i32
    %c0_i32_1 = arith.constant 0 : i32
    return %arg0, %c0_i32, %c0_i32_0 : i32, i32, i32
  }
}

</mosaic_0001>

<llo_original>
// kernel: tpu_custom_call.1
$region0: #{tpu_custom_call.1}
  #allocation0 [shape = 'u32[]', space=smem, size = 0x4, offset = 0x4, fixed_abs, tag = 'smem constant byte address 0x4 - core index']
  #allocation1 [shape = 'u32[144,128]{1,0:T(1,128)}', space=vmem, size = 0x12000, scoped, tag = 'internal scratch']
  #allocation2 [shape = 'f32[1,1]{1,0:T(1,128)S(1)}', space=vmem, size = 0x200, scoped, tag = 'scoped memory for tpu_custom_call.1']
  %s0 = inlined_call_operand.hbm [shape: f32[2,8,32], index: 0, kind: input, shape index: {}]
  %s1 = inlined_call_operand.vmem [shape: f32[1,32], index: 1, kind: input, shape index: {}]
  %s2 = inlined_call_operand.vmem [shape: f32[32,384], index: 2, kind: input, shape index: {}]
  %s3 = inlined_call_operand.hbm [shape: f32[8,128], index: 3, kind: input, shape index: {}]
  %s4 = inlined_call_operand.hbm [shape: f32[8,128], index: 4, kind: input, shape index: {}]
  %s5 = inlined_call_operand.hbm [shape: f32[8,128], index: 5, kind: input, shape index: {}]
  %s6 = inlined_call_operand.vmem [shape: f32[128,32], index: 6, kind: input, shape index: {}]
  %s7 = inlined_call_operand.vmem [shape: f32[1,32], index: 7, kind: input, shape index: {}]
  %s8 = inlined_call_operand.vmem [shape: f32[32,32], index: 8, kind: input, shape index: {}]
  %s9 = inlined_call_operand.vmem [shape: f32[1,32], index: 9, kind: input, shape index: {}]
  %s10 = inlined_call_operand.vmem [shape: f32[32,64], index: 10, kind: input, shape index: {}]
  %s11 = inlined_call_operand.vmem [shape: f32[1,64], index: 11, kind: input, shape index: {}]
  %s12 = inlined_call_operand.<no memory space> [shape: f32[1,1], index: 12, kind: input, shape index: {}]
  %s13 = inlined_call_operand.vmem [shape: f32[32,128], index: 13, kind: input, shape index: {}]
  %s14 = inlined_call_operand.vmem [shape: f32[1,128], index: 14, kind: input, shape index: {}]
  %s15 = inlined_call_operand.hbm [shape: f32[2,8,128], index: 15, kind: output, shape index: {}]
  %s16 = sld [smem:[#allocation0]]
  $region109: #{tpu_custom_call.1} parent=0
    _
  %s18 = ssub.s32 1, %s16
  %s19 = scalar_select 0, %s18, %s16
  %v20 = vstv %s12
  %21 = vst [vmem:[#allocation2] sm:$0x1] %v20
  $region1: #{tpu_custom_call.1} parent=0
    #allocation3 [shape = 'u8[8192]{0}', space=vmem, size = 0x2000, scoped, tag = 'input window, operand 0']
    #allocation4 [shape = 's32[2]{0}', space=sflag, size = 0x8, scoped, tag = 'scoped memory for tpu_custom_call.1']
    #allocation5 [shape = 's32[2]{0}', space=sflag, size = 0x8, scoped, tag = 'scoped memory for tpu_custom_call.1']
    #allocation6 [shape = 'u8[4096]{0}', space=vmem, size = 0x1000, scoped, tag = 'input window, operand 3, single buffered']
    #allocation7 [shape = 's32[1]{0}', space=sflag, size = 0x4, scoped, tag = 'scoped memory for tpu_custom_call.1']
    #allocation8 [shape = 'u8[4096]{0}', space=vmem, size = 0x1000, scoped, tag = 'input window, operand 4, single buffered']
    #allocation9 [shape = 'u8[4096]{0}', space=vmem, size = 0x1000, scoped, tag = 'input window, operand 5, single buffered']
    #allocation10 [shape = 's32[1]{0}', space=sflag, size = 0x4, scoped, tag = 'scoped memory for tpu_custom_call.1']
    #allocation11 [shape = 'u8[8192]{0}', space=vmem, size = 0x2000, scoped, tag = 'output window, operand 0']
    %22 = vsyncpa [#allocation4], 0
    %s23 = scalar_lea.sflag [#allocation4], 1
    %24 = vsyncpa %s23, 0
    %25 = vsyncpa [#allocation7], 0
    %26 = vsyncpa [#allocation10], 0
    %27 = vsyncpa [#allocation5], 0
    %s28 = scalar_lea.sflag [#allocation5], 1
    %29 = vsyncpa %s28, 0
    loop: start=0, step=1, limit=4
    $region2: #{tpu_custom_call.1} parent=1 // loop_pre_header
      _
    $region3: #{tpu_custom_call.1} parent=1 // loop_header
      %s31 = sphi 0, %s35
      %p32 = scmp.ge.s32.totalorder %s31, 4
      %s41 = sphi 0, %s43
      %s44 = sphi 0, %s41
      %s45 = sphi 0, %s44
      %s61 = sphi 0, %s45
      %s65 = sphi 0, %s65
      %s67 = sphi 0, %s65
      %s68 = sphi 0, %s67
      %s82 = sphi 0, %s68
      %s86 = sphi 0, %s86
      %s88 = sphi 0, %s86
      %s89 = sphi 0, %s88
      %s103 = sphi 0, %s89
      %s107 = sphi 0, %s107
      %s109 = sphi 0, %s107
      %s110 = sphi 0, %s109
      %s124 = sphi 0, %s110
      %s128 = sphi 0, %s128
      %s130 = sphi 0, %s128
      %s131 = sphi 0, %s130
      %s145 = sphi 0, %s131
      %s149 = sphi 0, %s149
      %s151 = sphi 0, %s149
      %s152 = sphi 0, %s151
      %s166 = sphi 0, %s152
      %s170 = sphi 0, %s170
      %s172 = sphi 0, %s170
      %s173 = sphi 0, %s172
      %s187 = sphi 0, %s173
      %s191 = sphi 0, %s191
      %s193 = sphi 0, %s191
      %s194 = sphi 0, %s193
      %s208 = sphi 0, %s194
      %s212 = sphi 0, %s212
      %s214 = sphi 0, %s212
      %s215 = sphi 0, %s214
      %s229 = sphi 0, %s215
      %s233 = sphi 0, %s233
      %s235 = sphi 0, %s233
      %s236 = sphi 0, %s235
      %s250 = sphi 0, %s236
      %s254 = sphi 0, %s254
      %s256 = sphi 0, %s254
      %s257 = sphi 0, %s256
      %s271 = sphi 0, %s257
      %s275 = sphi 0, %s275
      %s277 = sphi 0, %s275
      %s278 = sphi 0, %s277
      %s292 = sphi 0, %s278
      %s296 = sphi 0, %s296
      %s298 = sphi 0, %s296
      %s299 = sphi 0, %s298
      %s313 = sphi 0, %s299
      %s317 = sphi 0, %s317
      %s319 = sphi 0, %s317
      %s320 = sphi 0, %s319
      %s334 = sphi 0, %s320
      %s338 = sphi 0, %s338
      %s340 = sphi 0, %s338
      %s341 = sphi 0, %s340
      %s355 = sphi 0, %s341
      %s361 = sphi 0, %s363
      %s364 = sphi 0, %s361
      %s365 = sphi 0, %s364
      %s381 = sphi 0, %s365
    $region4: #{tpu_custom_call.1} parent=1 // loop_header_branch
      %34 = sbr.rel (%p32) target = $region8
    $region5: #{tpu_custom_call.1} parent=1 // loop_body
      %s36 = ssub.s32 %s31, 1
      %s37 = ssub.s32 %s31, 2
      %s38 = sadd.s32 %s31, 1
      %s39 = ssub.s32 %s31, %s38
      %p40 = scmp.eq.s32.totalorder %s39, 0
      %s42 = sadd.s32 %s41, 1
      %s43 = scalar_select %p40, %s41, %s42
      %p46 = pneg %p40
      %p47 = scmp.eq.s32.totalorder %s31, 1
      %p48 = por %p46, %p47
      %p49 = scmp.ne.s32.totalorder %s41, %s44
      %p50 = scmp.eq.s32.totalorder %s31, 0
      %p51 = por %p49, %p50
      %p52 = scmp.ne.s32.totalorder %s41, %s44
      %p53 = scmp.eq.s32.totalorder %s36, 1
      %p54 = por %p52, %p53
      %p55 = scmp.ne.s32.totalorder %s44, %s45
      %p56 = scmp.eq.s32.totalorder %s36, 0
      %p57 = por %p55, %p56
      %p58 = scmp.ne.s32.totalorder %s44, %s45
      %p59 = scmp.eq.s32.totalorder %s37, 1
      %p60 = por %p58, %p59
      %p62 = scmp.ne.s32.totalorder %s45, %s61
      %p63 = scmp.eq.s32.totalorder %s37, 0
      %p64 = por %p62, %p63
      %s66 = sadd.s32 %s65, 1
      %p69 = scmp.eq.s32.totalorder %s31, 1
      %p70 = scmp.ne.s32.totalorder %s65, %s67
      %p71 = scmp.eq.s32.totalorder %s31, 0
      %p72 = por %p70, %p71
      %p73 = scmp.ne.s32.totalorder %s65, %s67
      %p74 = scmp.eq.s32.totalorder %s36, 1
      %p75 = por %p73, %p74
      %p76 = scmp.ne.s32.totalorder %s67, %s68
      %p77 = scmp.eq.s32.totalorder %s36, 0
      %p78 = por %p76, %p77
      %p79 = scmp.ne.s32.totalorder %s67, %s68
      %p80 = scmp.eq.s32.totalorder %s37, 1
      %p81 = por %p79, %p80
      %p83 = scmp.ne.s32.totalorder %s68, %s82
      %p84 = scmp.eq.s32.totalorder %s37, 0
      %p85 = por %p83, %p84
      %s87 = sadd.s32 %s86, 1
      %p90 = scmp.eq.s32.totalorder %s31, 1
      %p91 = scmp.ne.s32.totalorder %s86, %s88
      %p92 = scmp.eq.s32.totalorder %s31, 0
      %p93 = por %p91, %p92
      %p94 = scmp.ne.s32.totalorder %s86, %s88
      %p95 = scmp.eq.s32.totalorder %s36, 1
      %p96 = por %p94, %p95
      %p97 = scmp.ne.s32.totalorder %s88, %s89
      %p98 = scmp.eq.s32.totalorder %s36, 0
      %p99 = por %p97, %p98
      %p100 = scmp.ne.s32.totalorder %s88, %s89
      %p101 = scmp.eq.s32.totalorder %s37, 1
      %p102 = por %p100, %p101
      %p104 = scmp.ne.s32.totalorder %s89, %s103
      %p105 = scmp.eq.s32.totalorder %s37, 0
      %p106 = por %p104, %p105
      %s108 = sadd.s32 %s107, 1
      %p111 = scmp.eq.s32.totalorder %s31, 1
      %p112 = scmp.ne.s32.totalorder %s107, %s109
      %p113 = scmp.eq.s32.totalorder %s31, 0
      %p114 = por %p112, %p113
      %p115 = scmp.ne.s32.totalorder %s107, %s109
      %p116 = scmp.eq.s32.totalorder %s36, 1
      %p117 = por %p115, %p116
      %p118 = scmp.ne.s32.totalorder %s109, %s110
      %p119 = scmp.eq.s32.totalorder %s36, 0
      %p120 = por %p118, %p119
      %p121 = scmp.ne.s32.totalorder %s109, %s110
      %p122 = scmp.eq.s32.totalorder %s37, 1
      %p123 = por %p121, %p122
      %p125 = scmp.ne.s32.totalorder %s110, %s124
      %p126 = scmp.eq.s32.totalorder %s37, 0
      %p127 = por %p125, %p126
      %s129 = sadd.s32 %s128, 1
      %p132 = scmp.eq.s32.totalorder %s31, 1
      %p133 = scmp.ne.s32.totalorder %s128, %s130
      %p134 = scmp.eq.s32.totalorder %s31, 0
      %p135 = por %p133, %p134
      %p136 = scmp.ne.s32.totalorder %s128, %s130
      %p137 = scmp.eq.s32.totalorder %s36, 1
      %p138 = por %p136, %p137
      %p139 = scmp.ne.s32.totalorder %s130, %s131
      %p140 = scmp.eq.s32.totalorder %s36, 0
      %p141 = por %p139, %p140
      %p142 = scmp.ne.s32.totalorder %s130, %s131
      %p143 = scmp.eq.s32.totalorder %s37, 1
      %p144 = por %p142, %p143
      %p146 = scmp.ne.s32.totalorder %s131, %s145
      %p147 = scmp.eq.s32.totalorder %s37, 0
      %p148 = por %p146, %p147
      %s150 = sadd.s32 %s149, 1
      %p153 = scmp.eq.s32.totalorder %s31, 1
      %p154 = scmp.ne.s32.totalorder %s149, %s151
      %p155 = scmp.eq.s32.totalorder %s31, 0
      %p156 = por %p154, %p155
      %p157 = scmp.ne.s32.totalorder %s149, %s151
      %p158 = scmp.eq.s32.totalorder %s36, 1
      %p159 = por %p157, %p158
      %p160 = scmp.ne.s32.totalorder %s151, %s152
      %p161 = scmp.eq.s32.totalorder %s36, 0
      %p162 = por %p160, %p161
      %p163 = scmp.ne.s32.totalorder %s151, %s152
      %p164 = scmp.eq.s32.totalorder %s37, 1
      %p165 = por %p163, %p164
      %p167 = scmp.ne.s32.totalorder %s152, %s166
      %p168 = scmp.eq.s32.totalorder %s37, 0
      %p169 = por %p167, %p168
      %s171 = sadd.s32 %s170, 1
      %p174 = scmp.eq.s32.totalorder %s31, 1
      %p175 = scmp.ne.s32.totalorder %s170, %s172
      %p176 = scmp.eq.s32.totalorder %s31, 0
      %p177 = por %p175, %p176
      %p178 = scmp.ne.s32.totalorder %s170, %s172
      %p179 = scmp.eq.s32.totalorder %s36, 1
      %p180 = por %p178, %p179
      %p181 = scmp.ne.s32.totalorder %s172, %s173
      %p182 = scmp.eq.s32.totalorder %s36, 0
      %p183 = por %p181, %p182
      %p184 = scmp.ne.s32.totalorder %s172, %s173
      %p185 = scmp.eq.s32.totalorder %s37, 1
      %p186 = por %p184, %p185
      %p188 = scmp.ne.s32.totalorder %s173, %s187
      %p189 = scmp.eq.s32.totalorder %s37, 0
      %p190 = por %p188, %p189
      %s192 = sadd.s32 %s191, 1
      %p195 = scmp.eq.s32.totalorder %s31, 1
      %p196 = scmp.ne.s32.totalorder %s191, %s193
      %p197 = scmp.eq.s32.totalorder %s31, 0
      %p198 = por %p196, %p197
      %p199 = scmp.ne.s32.totalorder %s191, %s193
      %p200 = scmp.eq.s32.totalorder %s36, 1
      %p201 = por %p199, %p200
      %p202 = scmp.ne.s32.totalorder %s193, %s194
      %p203 = scmp.eq.s32.totalorder %s36, 0
      %p204 = por %p202, %p203
      %p205 = scmp.ne.s32.totalorder %s193, %s194
      %p206 = scmp.eq.s32.totalorder %s37, 1
      %p207 = por %p205, %p206
      %p209 = scmp.ne.s32.totalorder %s194, %s208
      %p210 = scmp.eq.s32.totalorder %s37, 0
      %p211 = por %p209, %p210
      %s213 = sadd.s32 %s212, 1
      %p216 = scmp.eq.s32.totalorder %s31, 1
      %p217 = scmp.ne.s32.totalorder %s212, %s214
      %p218 = scmp.eq.s32.totalorder %s31, 0
      %p219 = por %p217, %p218
      %p220 = scmp.ne.s32.totalorder %s212, %s214
      %p221 = scmp.eq.s32.totalorder %s36, 1
      %p222 = por %p220, %p221
      %p223 = scmp.ne.s32.totalorder %s214, %s215
      %p224 = scmp.eq.s32.totalorder %s36, 0
      %p225 = por %p223, %p224
      %p226 = scmp.ne.s32.totalorder %s214, %s215
      %p227 = scmp.eq.s32.totalorder %s37, 1
      %p228 = por %p226, %p227
      %p230 = scmp.ne.s32.totalorder %s215, %s229
      %p231 = scmp.eq.s32.totalorder %s37, 0
      %p232 = por %p230, %p231
      %s234 = sadd.s32 %s233, 1
      %p237 = scmp.eq.s32.totalorder %s31, 1
      %p238 = scmp.ne.s32.totalorder %s233, %s235
      %p239 = scmp.eq.s32.totalorder %s31, 0
      %p240 = por %p238, %p239
      %p241 = scmp.ne.s32.totalorder %s233, %s235
      %p242 = scmp.eq.s32.totalorder %s36, 1
      %p243 = por %p241, %p242
      %p244 = scmp.ne.s32.totalorder %s235, %s236
      %p245 = scmp.eq.s32.totalorder %s36, 0
      %p246 = por %p244, %p245
      %p247 = scmp.ne.s32.totalorder %s235, %s236
      %p248 = scmp.eq.s32.totalorder %s37, 1
      %p249 = por %p247, %p248
      %p251 = scmp.ne.s32.totalorder %s236, %s250
      %p252 = scmp.eq.s32.totalorder %s37, 0
      %p253 = por %p251, %p252
      %s255 = sadd.s32 %s254, 1
      %p258 = scmp.eq.s32.totalorder %s31, 1
      %p259 = scmp.ne.s32.totalorder %s254, %s256
      %p260 = scmp.eq.s32.totalorder %s31, 0
      %p261 = por %p259, %p260
      %p262 = scmp.ne.s32.totalorder %s254, %s256
      %p263 = scmp.eq.s32.totalorder %s36, 1
      %p264 = por %p262, %p263
      %p265 = scmp.ne.s32.totalorder %s256, %s257
      %p266 = scmp.eq.s32.totalorder %s36, 0
      %p267 = por %p265, %p266
      %p268 = scmp.ne.s32.totalorder %s256, %s257
      %p269 = scmp.eq.s32.totalorder %s37, 1
      %p270 = por %p268, %p269
      %p272 = scmp.ne.s32.totalorder %s257, %s271
      %p273 = scmp.eq.s32.totalorder %s37, 0
      %p274 = por %p272, %p273
      %s276 = sadd.s32 %s275, 1
      %p279 = scmp.eq.s32.totalorder %s31, 1
      %p280 = scmp.ne.s32.totalorder %s275, %s277
      %p281 = scmp.eq.s32.totalorder %s31, 0
      %p282 = por %p280, %p281
      %p283 = scmp.ne.s32.totalorder %s275, %s277
      %p284 = scmp.eq.s32.totalorder %s36, 1
      %p285 = por %p283, %p284
      %p286 = scmp.ne.s32.totalorder %s277, %s278
      %p287 = scmp.eq.s32.totalorder %s36, 0
      %p288 = por %p286, %p287
      %p289 = scmp.ne.s32.totalorder %s277, %s278
      %p290 = scmp.eq.s32.totalorder %s37, 1
      %p291 = por %p289, %p290
      %p293 = scmp.ne.s32.totalorder %s278, %s292
      %p294 = scmp.eq.s32.totalorder %s37, 0
      %p295 = por %p293, %p294
      %s297 = sadd.s32 %s296, 1
      %p300 = scmp.eq.s32.totalorder %s31, 1
      %p301 = scmp.ne.s32.totalorder %s296, %s298
      %p302 = scmp.eq.s32.totalorder %s31, 0
      %p303 = por %p301, %p302
      %p304 = scmp.ne.s32.totalorder %s296, %s298
      %p305 = scmp.eq.s32.totalorder %s36, 1
      %p306 = por %p304, %p305
      %p307 = scmp.ne.s32.totalorder %s298, %s299
      %p308 = scmp.eq.s32.totalorder %s36, 0
      %p309 = por %p307, %p308
      %p310 = scmp.ne.s32.totalorder %s298, %s299
      %p311 = scmp.eq.s32.totalorder %s37, 1
      %p312 = por %p310, %p311
      %p314 = scmp.ne.s32.totalorder %s299, %s313
      %p315 = scmp.eq.s32.totalorder %s37, 0
      %p316 = por %p314, %p315
      %s318 = sadd.s32 %s317, 1
      %p321 = scmp.eq.s32.totalorder %s31, 1
      %p322 = scmp.ne.s32.totalorder %s317, %s319
      %p323 = scmp.eq.s32.totalorder %s31, 0
      %p324 = por %p322, %p323
      %p325 = scmp.ne.s32.totalorder %s317, %s319
      %p326 = scmp.eq.s32.totalorder %s36, 1
      %p327 = por %p325, %p326
      %p328 = scmp.ne.s32.totalorder %s319, %s320
      %p329 = scmp.eq.s32.totalorder %s36, 0
      %p330 = por %p328, %p329
      %p331 = scmp.ne.s32.totalorder %s319, %s320
      %p332 = scmp.eq.s32.totalorder %s37, 1
      %p333 = por %p331, %p332
      %p335 = scmp.ne.s32.totalorder %s320, %s334
      %p336 = scmp.eq.s32.totalorder %s37, 0
      %p337 = por %p335, %p336
      %s339 = sadd.s32 %s338, 1
      %p342 = scmp.eq.s32.totalorder %s31, 1
      %p343 = scmp.ne.s32.totalorder %s338, %s340
      %p344 = scmp.eq.s32.totalorder %s31, 0
      %p345 = por %p343, %p344
      %p346 = scmp.ne.s32.totalorder %s338, %s340
      %p347 = scmp.eq.s32.totalorder %s36, 1
      %p348 = por %p346, %p347
      %p349 = scmp.ne.s32.totalorder %s340, %s341
      %p350 = scmp.eq.s32.totalorder %s36, 0
      %p351 = por %p349, %p350
      %p352 = scmp.ne.s32.totalorder %s340, %s341
      %p353 = scmp.eq.s32.totalorder %s37, 1
      %p354 = por %p352, %p353
      %p356 = scmp.ne.s32.totalorder %s341, %s355
      %p357 = scmp.eq.s32.totalorder %s37, 0
      %p358 = por %p356, %p357
      %s359 = ssub.s32 %s31, %s38
      %p360 = scmp.eq.s32.totalorder %s359, 0
      %s362 = sadd.s32 %s361, 1
      %s363 = scalar_select %p360, %s361, %s362
      %p366 = pneg %p360
      %p367 = scmp.eq.s32.totalorder %s31, 1
      %p368 = por %p366, %p367
      %p369 = scmp.ne.s32.totalorder %s361, %s364
      %p370 = scmp.eq.s32.totalorder %s31, 0
      %p371 = por %p369, %p370
      %p372 = scmp.ne.s32.totalorder %s361, %s364
      %p373 = scmp.eq.s32.totalorder %s36, 1
      %p374 = por %p372, %p373
      %p375 = scmp.ne.s32.totalorder %s364, %s365
      %p376 = scmp.eq.s32.totalorder %s36, 0
      %p377 = por %p375, %p376
      %p378 = scmp.ne.s32.totalorder %s364, %s365
      %p379 = scmp.eq.s32.totalorder %s37, 1
      %p380 = por %p378, %p379
      %p382 = scmp.ne.s32.totalorder %s365, %s381
      %p383 = scmp.eq.s32.totalorder %s37, 0
      %p384 = por %p382, %p383
      %p385 = scmp.le.s32.totalorder 1, %s31
      %p386 = scmp.lt.s32.totalorder %s31, 3
      %p387 = pnand %p385, %p386
      %p388 = pneg %p387
      // Predicated region
      $region9: #{tpu_custom_call.1} parent=5 // pred_check
        _
      $region10: #{tpu_custom_call.1} parent=5 // pred_check_branch
        %390 = sbr.rel (%p387) target = $region12
      $region11: #{tpu_custom_call.1} parent=5 // pred_region
        %s391 = ssub.s32 %s31, 1
        // Predicated region
        $region13: #{tpu_custom_call.1} parent=11 // pred_check
          %p392 = pneg %p78
        $region14: #{tpu_custom_call.1} parent=11 // pred_check_branch
          %394 = sbr.rel (%p392) target = $region16
        $region15: #{tpu_custom_call.1} parent=11 // pred_region
          _
        $region16: #{tpu_custom_call.1} parent=11 // pred_fallthru
          _
        // Predicated region
        $region17: #{tpu_custom_call.1} parent=11 // pred_check
          %p395 = pneg %p99
        $region18: #{tpu_custom_call.1} parent=11 // pred_check_branch
          %397 = sbr.rel (%p395) target = $region20
        $region19: #{tpu_custom_call.1} parent=11 // pred_region
          _
        $region20: #{tpu_custom_call.1} parent=11 // pred_fallthru
          _
        // Predicated region
        $region21: #{tpu_custom_call.1} parent=11 // pred_check
          %p398 = pneg %p120
        $region22: #{tpu_custom_call.1} parent=11 // pred_check_branch
          %400 = sbr.rel (%p398) target = $region24
        $region23: #{tpu_custom_call.1} parent=11 // pred_region
          %s402 = ssub.s32 128, 128
          %403 = vsyncadd [#allocation7], %s402
          %s405 = sshll.u32 [#allocation6], 4
          %s406 = int_to_ptr.vmem [resolvable:$true] %s405
          %408 = dma.hbm_to_vmem [thread:$0]  %s3, 128, %s406, [#allocation7]
        $region24: #{tpu_custom_call.1} parent=11 // pred_fallthru
          _
        // Predicated region
        $region25: #{tpu_custom_call.1} parent=11 // pred_check
          %p409 = pneg %p141
        $region26: #{tpu_custom_call.1} parent=11 // pred_check_branch
          %411 = sbr.rel (%p409) target = $region28
        $region27: #{tpu_custom_call.1} parent=11 // pred_region
          %s413 = ssub.s32 128, 128
          %414 = vsyncadd [#allocation7], %s413
          %s416 = sshll.u32 [#allocation8], 4
          %s417 = int_to_ptr.vmem [resolvable:$true] %s416
          %419 = dma.hbm_to_vmem [thread:$0]  %s4, 128, %s417, [#allocation7]
        $region28: #{tpu_custom_call.1} parent=11 // pred_fallthru
          _
        // Predicated region
        $region29: #{tpu_custom_call.1} parent=11 // pred_check
          %p420 = pneg %p162
        $region30: #{tpu_custom_call.1} parent=11 // pred_check_branch
          %422 = sbr.rel (%p420) target = $region32
        $region31: #{tpu_custom_call.1} parent=11 // pred_region
          %s424 = ssub.s32 128, 128
          %425 = vsyncadd [#allocation10], %s424
          %s427 = sshll.u32 [#allocation9], 4
          %s428 = int_to_ptr.vmem [resolvable:$true] %s427
          %430 = dma.hbm_to_vmem [thread:$0]  %s5, 128, %s428, [#allocation10]
        $region32: #{tpu_custom_call.1} parent=11 // pred_fallthru
          _
        // Predicated region
        $region33: #{tpu_custom_call.1} parent=11 // pred_check
          %p431 = pneg %p183
        $region34: #{tpu_custom_call.1} parent=11 // pred_check_branch
          %433 = sbr.rel (%p431) target = $region36
        $region35: #{tpu_custom_call.1} parent=11 // pred_region
          _
        $region36: #{tpu_custom_call.1} parent=11 // pred_fallthru
          _
        // Predicated region
        $region37: #{tpu_custom_call.1} parent=11 // pred_check
          %p434 = pneg %p204
        $region38: #{tpu_custom_call.1} parent=11 // pred_check_branch
          %436 = sbr.rel (%p434) target = $region40
        $region39: #{tpu_custom_call.1} parent=11 // pred_region
          _
        $region40: #{tpu_custom_call.1} parent=11 // pred_fallthru
          _
        // Predicated region
        $region41: #{tpu_custom_call.1} parent=11 // pred_check
          %p437 = pneg %p225
        $region42: #{tpu_custom_call.1} parent=11 // pred_check_branch
          %439 = sbr.rel (%p437) target = $region44
        $region43: #{tpu_custom_call.1} parent=11 // pred_region
          _
        $region44: #{tpu_custom_call.1} parent=11 // pred_fallthru
          _
        // Predicated region
        $region45: #{tpu_custom_call.1} parent=11 // pred_check
          %p440 = pneg %p246
        $region46: #{tpu_custom_call.1} parent=11 // pred_check_branch
          %442 = sbr.rel (%p440) target = $region48
        $region47: #{tpu_custom_call.1} parent=11 // pred_region
          _
        $region48: #{tpu_custom_call.1} parent=11 // pred_fallthru
          _
        // Predicated region
        $region49: #{tpu_custom_call.1} parent=11 // pred_check
          %p443 = pneg %p267
        $region50: #{tpu_custom_call.1} parent=11 // pred_check_branch
          %445 = sbr.rel (%p443) target = $region52
        $region51: #{tpu_custom_call.1} parent=11 // pred_region
          _
        $region52: #{tpu_custom_call.1} parent=11 // pred_fallthru
          _
        // Predicated region
        $region53: #{tpu_custom_call.1} parent=11 // pred_check
          %p446 = pneg %p288
        $region54: #{tpu_custom_call.1} parent=11 // pred_check_branch
          %448 = sbr.rel (%p446) target = $region56
        $region55: #{tpu_custom_call.1} parent=11 // pred_region
          _
        $region56: #{tpu_custom_call.1} parent=11 // pred_fallthru
          _
        // Predicated region
        $region57: #{tpu_custom_call.1} parent=11 // pred_check
          %p449 = pneg %p309
        $region58: #{tpu_custom_call.1} parent=11 // pred_check_branch
          %451 = sbr.rel (%p449) target = $region60
        $region59: #{tpu_custom_call.1} parent=11 // pred_region
          _
        $region60: #{tpu_custom_call.1} parent=11 // pred_fallthru
          _
        // Predicated region
        $region61: #{tpu_custom_call.1} parent=11 // pred_check
          %p452 = pneg %p330
        $region62: #{tpu_custom_call.1} parent=11 // pred_check_branch
          %454 = sbr.rel (%p452) target = $region64
        $region63: #{tpu_custom_call.1} parent=11 // pred_region
          _
        $region64: #{tpu_custom_call.1} parent=11 // pred_fallthru
          _
        // Predicated region
        $region65: #{tpu_custom_call.1} parent=11 // pred_check
          %p455 = pneg %p351
        $region66: #{tpu_custom_call.1} parent=11 // pred_check_branch
          %457 = sbr.rel (%p455) target = $region68
        $region67: #{tpu_custom_call.1} parent=11 // pred_region
          _
        $region68: #{tpu_custom_call.1} parent=11 // pred_fallthru
          _
      $region12: #{tpu_custom_call.1} parent=5 // pred_fallthru
        _
      %p458 = scmp.lt.s32.totalorder %s31, 2
      // Predicated region
      $region69: #{tpu_custom_call.1} parent=5 // pred_check
        %p459 = pneg %p458
      $region70: #{tpu_custom_call.1} parent=5 // pred_check_branch
        %461 = sbr.rel (%p459) target = $region72
      $region71: #{tpu_custom_call.1} parent=5 // pred_region
        // Predicated region
        $region73: #{tpu_custom_call.1} parent=71 // pred_check
          %p462 = pneg %p51
        $region74: #{tpu_custom_call.1} parent=71 // pred_check_branch
          %464 = sbr.rel (%p462) target = $region76
        $region75: #{tpu_custom_call.1} parent=71 // pred_region
          %s465 = sand.u32 %s41, 1
          %s466 = scalar_lea.sflag [#allocation4], %s465
          %s467 = sand.u32 %s41, 1
          %s468 = smul.addr %s467, 8
          %s469 = scalar_lea.vmem [#allocation3], %s468
          %s471 = ssub.s32 128, 128
          %472 = vsyncadd %s466, %s471
          %s473 = smul.addr %s31, 128
          %s474 = scalar_lea.hbm %s0, %s473
          %s476 = sshll.u32 %s469, 4
          %s477 = int_to_ptr.vmem [resolvable:$true] %s476
          %479 = dma.hbm_to_vmem [thread:$0]  %s474, 128, %s477, %s466
        $region76: #{tpu_custom_call.1} parent=71 // pred_fallthru
          _
      $region72: #{tpu_custom_call.1} parent=5 // pred_fallthru
        _
      %p480 = scmp.le.s32.totalorder 1, %s31
      %p481 = scmp.lt.s32.totalorder %s31, 3
      %p482 = pnand %p480, %p481
      %p483 = pneg %p482
      // Predicated region
      $region77: #{tpu_custom_call.1} parent=5 // pred_check
        _
      $region78: #{tpu_custom_call.1} parent=5 // pred_check_branch
        %485 = sbr.rel (%p482) target = $region80
      $region79: #{tpu_custom_call.1} parent=5 // pred_region
        %s486 = ssub.s32 %s31, 1
        %s487 = sand.u32 %s44, 1
        %s488 = scalar_lea.sflag [#allocation4], %s487
        %s489 = sand.u32 %s44, 1
        %s490 = smul.addr %s489, 8
        %s491 = scalar_lea.vmem [#allocation3], %s490
        // Predicated region
        $region81: #{tpu_custom_call.1} parent=79 // pred_check
          %p492 = pneg %p57
        $region82: #{tpu_custom_call.1} parent=79 // pred_check_branch
          %494 = sbr.rel (%p492) target = $region84
        $region83: #{tpu_custom_call.1} parent=79 // pred_region
          %495 = dma.done %s488, 128
        $region84: #{tpu_custom_call.1} parent=79 // pred_fallthru
          _
        // Predicated region
        $region85: #{tpu_custom_call.1} parent=79 // pred_check
          %p496 = pneg %p120
        $region86: #{tpu_custom_call.1} parent=79 // pred_check_branch
          %498 = sbr.rel (%p496) target = $region88
        $region87: #{tpu_custom_call.1} parent=79 // pred_region
          %499 = dma.done [#allocation7], 128
        $region88: #{tpu_custom_call.1} parent=79 // pred_fallthru
          _
        // Predicated region
        $region89: #{tpu_custom_call.1} parent=79 // pred_check
          %p500 = pneg %p141
        $region90: #{tpu_custom_call.1} parent=79 // pred_check_branch
          %502 = sbr.rel (%p500) target = $region92
        $region91: #{tpu_custom_call.1} parent=79 // pred_region
          %503 = dma.done [#allocation7], 128
        $region92: #{tpu_custom_call.1} parent=79 // pred_fallthru
          _
        // Predicated region
        $region93: #{tpu_custom_call.1} parent=79 // pred_check
          %p504 = pneg %p162
        $region94: #{tpu_custom_call.1} parent=79 // pred_check_branch
          %506 = sbr.rel (%p504) target = $region96
        $region95: #{tpu_custom_call.1} parent=79 // pred_region
          %507 = dma.done [#allocation10], 128
        $region96: #{tpu_custom_call.1} parent=79 // pred_fallthru
          _
        %s508 = sand.u32 %s44, 1
        %s509 = scalar_lea.sflag [#allocation4], %s508
        %s510 = sand.u32 %s44, 1
        %s511 = smul.addr %s510, 8
        %s512 = scalar_lea.vmem [#allocation3], %s511
        %p513 = pneg %p57
        %p514 = pneg %p54
        %p515 = pneg %p78
        %p516 = pneg %p75
        %p517 = pneg %p99
        %p518 = pneg %p96
        %p519 = pneg %p120
        %p520 = pneg %p117
        %p521 = pneg %p141
        %p522 = pneg %p138
        %p523 = pneg %p162
        %p524 = pneg %p159
        %p525 = pneg %p183
        %p526 = pneg %p180
        %p527 = pneg %p204
        %p528 = pneg %p201
        %p529 = pneg %p225
        %p530 = pneg %p222
        %p531 = pneg %p246
        %p532 = pneg %p243
        %p533 = pneg %p267
        %p534 = pneg %p264
        %p535 = pneg %p288
        %p536 = pneg %p285
        %p537 = pneg %p309
        %p538 = pneg %p306
        %p539 = pneg %p330
        %p540 = pneg %p327
        %p541 = pneg %p351
        %p542 = pneg %p348
        %p543 = pneg %p377
        %p544 = pneg %p374
        %s545 = sand.u32 %s364, 1
        %s546 = scalar_lea.sflag [#allocation5], %s545
        %s547 = sand.u32 %s364, 1
        %s548 = smul.addr %s547, 8
        %s549 = scalar_lea.vmem [#allocation11], %s548
        %v550 = vld [vmem:[%s491] sm:$0xff]
        %v551 = vld [vmem:[%s1] sm:$0x1]
        %v552 = vmul.f32 %v550, %v550
        %vm553 = vcmask 261120
        %v554 = vsel %vm553, %v552, 0.0
        %555 = vadd.xlane.f32.xlu0 %v554
        %v556 = vpop.xlane.xlu0 %555
        %v557 = vrcp.pop 32.0
        %v558 = vmul.f32 %v556, %v557
        %v559 = vadd.f32 %v558, 1e-08
        %v560 = vrsqrt.pop %v559
        %v561 = vmul.f32 %v550, %v560
        %v563 = vlaneseq
        %v564 = vshrl.u32 %v563, 7
        %v565 = vsub.s32 0, %v564
        %v566 = vrot.slane %v551, %v565
        %v568 = vmul.f32 %v561, %v566
        %v569 = vld [vmem:[%s2] sm:$0xff]
        %v570 = vld [vmem:[%s2 + $0x8] sm:$0xff]
        %v571 = vld [vmem:[%s2 + $0x10] sm:$0xff]
        %v572 = vld [vmem:[%s2 + $0x18] sm:$0xff]
        %v573 = vld [vmem:[%s2 + $0x20] sm:$0xff]
        %v574 = vld [vmem:[%s2 + $0x28] sm:$0xff]
        %v575 = vld [vmem:[%s2 + $0x30] sm:$0xff]
        %v576 = vld [vmem:[%s2 + $0x38] sm:$0xff]
        %v577 = vld [vmem:[%s2 + $0x40] sm:$0xff]
        %v578 = vld [vmem:[%s2 + $0x48] sm:$0xff]
        %v579 = vld [vmem:[%s2 + $0x50] sm:$0xff]
        %v580 = vld [vmem:[%s2 + $0x58] sm:$0xff]
        %v582 = vsel %vm553, %v568, 0
        %584 = vmatprep.subr.mxu0 %v570
        %585 = vmatpush1.msra.mxu0 %v569
        %586 = vmatprep.subr.mxu0 %v573
        %587 = vmatpush1.msra.mxu0 %v572
        %588 = vmatprep.subr.mxu0 %v576
        %589 = vmatpush1.msra.mxu0 %v575
        %590 = vmatprep.subr.mxu0 %v579
        %591 = vmatpush1.msra.mxu0 %v578
        %592 = vmatprep.subr.mxu0 0.0
        %593 = vmatpush1.msra.mxu0 0.0
        %594 = vmatprep.subr.mxu0 0.0
        %595 = vmatpush1.msra.mxu0 0.0
        %596 = vmatprep.subr.mxu0 0.0
        %597 = vmatpush1.msra.mxu0 0.0
        %598 = vmatprep.subr.mxu0 0.0
        %599 = vmatpush1.msra.mxu0 0.0
        %600 = vmatprep.subr.mxu0 0.0
        %601 = vmatpush1.msra.mxu0 0.0
        %602 = vmatprep.subr.mxu0 0.0
        %603 = vmatpush1.msra.mxu0 0.0
        %604 = vmatprep.subr.mxu0 0.0
        %605 = vmatpush1.msra.mxu0 0.0
        %606 = vmatprep.subr.mxu0 0.0
        %607 = vmatpush1.msra.mxu0 0.0
        %608 = vmatprep.subr.mxu0 0.0
        %609 = vmatpush1.msra.mxu0 0.0
        %610 = vmatprep.subr.mxu0 0.0
        %611 = vmatpush1.msra.mxu0 0.0
        %612 = vmatprep.subr.mxu0 0.0
        %613 = vmatpush1.msra.mxu0 0.0
        %614 = vmatprep.subr.mxu0 0.0
        %615 = vmatpush1.msra.mxu0 0.0
        %616 = vmatprep.subr.mxu0 0.0
        %617 = vmatpush1.msra.mxu0 0.0
        %618 = vmatprep.subr.mxu0 0.0
        %619 = vmatpush1.msra.mxu0 0.0
        %620 = vmatprep.subr.mxu0 0.0
        %621 = vmatpush1.msra.mxu0 0.0
        %622 = vmatprep.subr.mxu0 0.0
        %623 = vmatpush1.msra.mxu0 0.0
        %624 = vmatprep.subr.mxu0 0.0
        %625 = vmatpush1.msra.mxu0 0.0
        %626 = vmatprep.subr.mxu0 0.0
        %627 = vmatpush1.msra.mxu0 0.0
        %628 = vmatprep.subr.mxu0 0.0
        %629 = vmatpush1.msra.mxu0 0.0
        %630 = vmatprep.subr.mxu0 0.0
        %631 = vmatpush1.msra.mxu0 0.0
        %632 = vmatprep.subr.mxu0 0.0
        %633 = vmatpush1.msra.mxu0 0.0
        %634 = vmatprep.subr.mxu0 0.0
        %635 = vmatpush1.msra.mxu0 0.0
        %636 = vmatprep.subr.mxu0 0.0
        %637 = vmatpush1.msra.mxu0 0.0
        %638 = vmatprep.subr.mxu0 0.0
        %639 = vmatpush1.msra.mxu0 0.0
        %640 = vmatprep.subr.mxu0 0.0
        %641 = vmatpush1.msra.mxu0 0.0
        %642 = vmatprep.subr.mxu0 0.0
        %643 = vmatpush1.msra.mxu0 0.0
        %644 = vmatprep.subr.mxu0 0.0
        %645 = vmatpush1.msra.mxu0 0.0
        %646 = vmatprep.subr.mxu0 0.0
        %647 = vmatpush1.msra.mxu0 0.0
        %648 = vmatprep.mubr.f32.mxu0 0.0
        %649 = vmatmul.mubr.f32.gmra.mrb[0].mxu0 %v582
        %v650 = vpop.f32.mrb[0].mxu0
        %v651 = vadd.f32 0.0, %v650
        %v652 = vpop.f32.mrb[0].mxu0
        %v653 = vadd.f32 0.0, %v652
        %654 = vdwg.mxu0
        %655 = vmatprep.subr.mxu0 0.0
        %656 = vmatpush1.msra.mxu0 %v571
        %657 = vmatprep.subr.mxu0 0.0
        %658 = vmatpush1.msra.mxu0 %v574
        %659 = vmatprep.subr.mxu0 0.0
        %660 = vmatpush1.msra.mxu0 %v577
        %661 = vmatprep.subr.mxu0 0.0
        %662 = vmatpush1.msra.mxu0 %v580
        %663 = vmatprep.subr.mxu0 0.0
        %664 = vmatpush1.msra.mxu0 0.0
        %665 = vmatprep.subr.mxu0 0.0
        %666 = vmatpush1.msra.mxu0 0.0
        %667 = vmatprep.subr.mxu0 0.0
        %668 = vmatpush1.msra.mxu0 0.0
        %669 = vmatprep.subr.mxu0 0.0
        %670 = vmatpush1.msra.mxu0 0.0
        %671 = vmatprep.subr.mxu0 0.0
        %672 = vmatpush1.msra.mxu0 0.0
        %673 = vmatprep.subr.mxu0 0.0
        %674 = vmatpush1.msra.mxu0 0.0
        %675 = vmatprep.subr.mxu0 0.0
        %676 = vmatpush1.msra.mxu0 0.0
        %677 = vmatprep.subr.mxu0 0.0
        %678 = vmatpush1.msra.mxu0 0.0
        %679 = vmatprep.subr.mxu0 0.0
        %680 = vmatpush1.msra.mxu0 0.0
        %681 = vmatprep.subr.mxu0 0.0
        %682 = vmatpush1.msra.mxu0 0.0
        %683 = vmatprep.subr.mxu0 0.0
        %684 = vmatpush1.msra.mxu0 0.0
        %685 = vmatprep.subr.mxu0 0.0
        %686 = vmatpush1.msra.mxu0 0.0
        %687 = vmatprep.subr.mxu0 0.0
        %688 = vmatpush1.msra.mxu0 0.0
        %689 = vmatprep.subr.mxu0 0.0
        %690 = vmatpush1.msra.mxu0 0.0
        %691 = vmatprep.subr.mxu0 0.0
        %692 = vmatpush1.msra.mxu0 0.0
        %693 = vmatprep.subr.mxu0 0.0
        %694 = vmatpush1.msra.mxu0 0.0
        %695 = vmatprep.subr.mxu0 0.0
        %696 = vmatpush1.msra.mxu0 0.0
        %697 = vmatprep.subr.mxu0 0.0
        %698 = vmatpush1.msra.mxu0 0.0
        %699 = vmatprep.subr.mxu0 0.0
        %700 = vmatpush1.msra.mxu0 0.0
        %701 = vmatprep.subr.mxu0 0.0
        %702 = vmatpush1.msra.mxu0 0.0
        %703 = vmatprep.subr.mxu0 0.0
        %704 = vmatpush1.msra.mxu0 0.0
        %705 = vmatprep.subr.mxu0 0.0
        %706 = vmatpush1.msra.mxu0 0.0
        %707 = vmatprep.subr.mxu0 0.0
        %708 = vmatpush1.msra.mxu0 0.0
        %709 = vmatprep.subr.mxu0 0.0
        %710 = vmatpush1.msra.mxu0 0.0
        %711 = vmatprep.subr.mxu0 0.0
        %712 = vmatpush1.msra.mxu0 0.0
        %713 = vmatprep.subr.mxu0 0.0
        %714 = vmatpush1.msra.mxu0 0.0
        %715 = vmatprep.subr.mxu0 0.0
        %716 = vmatpush1.msra.mxu0 0.0
        %717 = vmatprep.subr.mxu0 0.0
        %718 = vmatpush1.msra.mxu0 0.0
        %719 = vmatprep.mubr.f32.mxu0 0.0
        %720 = vmatmul.mubr.f32.gmra.mrb[0].mxu0 %v582
        %v721 = vpop.f32.mrb[0].mxu0
        %v722 = vadd.f32 0.0, %v721
        %v723 = vpop.f32.mrb[0].mxu0
        %724 = vdwg.mxu0
        %v725 = vld [vmem:[#allocation6] sm:$0xff]
        %v726 = vld [vmem:[#allocation8] sm:$0xff]
        %v727 = vld [vmem:[#allocation9] sm:$0xff]
        %728 = vrot.lane.b32.xlu0 %v651, 127
        %v729 = vpop.permute.xlu0 %728
        %730 = vrot.lane.b32.xlu0 %v651, 1
        %v731 = vpop.permute.xlu0 %730
        %v732 = vmul.f32 %v651, %v725
        %v733 = vmul.f32 %v729, %v726
        %v734 = vadd.f32 %v732, %v733
        %v735 = vmul.f32 %v731, %v727
        %v736 = vadd.f32 %v734, %v735
        %737 = vrot.lane.b32.xlu0 %v653, 127
        %v738 = vpop.permute.xlu0 %737
        %739 = vrot.lane.b32.xlu0 %v653, 1
        %v740 = vpop.permute.xlu0 %739
        %v741 = vmul.f32 %v653, %v725
        %v742 = vmul.f32 %v738, %v726
        %v743 = vadd.f32 %v741, %v742
        %v744 = vmul.f32 %v740, %v727
        %v745 = vadd.f32 %v743, %v744
        %v746 = vlaneseq
        %v747 = vshrl.u32 %v746, 7
        %v748 = vlaneseq
        %v749 = vand.u32 %v748, 127
        %vm750 = vcmp.le.s32.totalorder %v749, %v747
        %v752 = vsel %vm553, %v736, 0
        %v755 = vsel %vm553, %v745, 0
        %757 = vmatprep.subr.mxu0 0.0
        %758 = vmatpush1.xpose.msra.mxu0 %v755
        %759 = vmatprep.subr.mxu0 0.0
        %760 = vmatpush1.xpose.msra.mxu0 0.0
        %761 = vmatprep.subr.mxu0 0.0
        %762 = vmatpush1.xpose.msra.mxu0 0.0
        %763 = vmatprep.subr.mxu0 0.0
        %764 = vmatpush1.xpose.msra.mxu0 0.0
        %765 = vmatprep.subr.mxu0 0.0
        %766 = vmatpush1.xpose.msra.mxu0 0.0
        %767 = vmatprep.subr.mxu0 0.0
        %768 = vmatpush1.xpose.msra.mxu0 0.0
        %769 = vmatprep.subr.mxu0 0.0
        %770 = vmatpush1.xpose.msra.mxu0 0.0
        %771 = vmatprep.subr.mxu0 0.0
        %772 = vmatpush1.xpose.msra.mxu0 0.0
        %773 = vmatprep.subr.mxu0 0.0
        %774 = vmatpush1.xpose.msra.mxu0 0.0
        %775 = vmatprep.subr.mxu0 0.0
        %776 = vmatpush1.xpose.msra.mxu0 0.0
        %777 = vmatprep.subr.mxu0 0.0
        %778 = vmatpush1.xpose.msra.mxu0 0.0
        %779 = vmatprep.subr.mxu0 0.0
        %780 = vmatpush1.xpose.msra.mxu0 0.0
        %781 = vmatprep.subr.mxu0 0.0
        %782 = vmatpush1.xpose.msra.mxu0 0.0
        %783 = vmatprep.subr.mxu0 0.0
        %784 = vmatpush1.xpose.msra.mxu0 0.0
        %785 = vmatprep.subr.mxu0 0.0
        %786 = vmatpush1.xpose.msra.mxu0 0.0
        %787 = vmatprep.subr.mxu0 0.0
        %788 = vmatpush1.xpose.msra.mxu0 0.0
        %789 = vmatprep.subr.mxu0 0.0
        %790 = vmatpush1.xpose.msra.mxu0 0.0
        %791 = vmatprep.subr.mxu0 0.0
        %792 = vmatpush1.xpose.msra.mxu0 0.0
        %793 = vmatprep.subr.mxu0 0.0
        %794 = vmatpush1.xpose.msra.mxu0 0.0
        %795 = vmatprep.subr.mxu0 0.0
        %796 = vmatpush1.xpose.msra.mxu0 0.0
        %797 = vmatprep.subr.mxu0 0.0
        %798 = vmatpush1.xpose.msra.mxu0 0.0
        %799 = vmatprep.subr.mxu0 0.0
        %800 = vmatpush1.xpose.msra.mxu0 0.0
        %801 = vmatprep.subr.mxu0 0.0
        %802 = vmatpush1.xpose.msra.mxu0 0.0
        %803 = vmatprep.subr.mxu0 0.0
        %804 = vmatpush1.xpose.msra.mxu0 0.0
        %805 = vmatprep.subr.mxu0 0.0
        %806 = vmatpush1.xpose.msra.mxu0 0.0
        %807 = vmatprep.subr.mxu0 0.0
        %808 = vmatpush1.xpose.msra.mxu0 0.0
        %809 = vmatprep.subr.mxu0 0.0
        %810 = vmatpush1.xpose.msra.mxu0 0.0
        %811 = vmatprep.subr.mxu0 0.0
        %812 = vmatpush1.xpose.msra.mxu0 0.0
        %813 = vmatprep.subr.mxu0 0.0
        %814 = vmatpush1.xpose.msra.mxu0 0.0
        %815 = vmatprep.subr.mxu0 0.0
        %816 = vmatpush1.xpose.msra.mxu0 0.0
        %817 = vmatprep.subr.mxu0 0.0
        %818 = vmatpush1.xpose.msra.mxu0 0.0
        %819 = vmatprep.subr.mxu0 0.0
        %820 = vmatpush1.xpose.msra.mxu0 0.0
        %821 = vmatprep.mubr.f32.mxu0 0.0
        %822 = vmatmul.mubr.f32.gmra.mrb[0].mxu0 %v752
        %v823 = vpop.f32.mrb[0].mxu0
        %v824 = vadd.f32 0.0, %v823
        %v825 = vpop.f32.mrb[0].mxu0
        %826 = vdwg.mxu0
        %v827 = vmul.f32 %v824, 0.17677669
        %v828 = vsel %vm750, %v827, -1e+30
        %vm829 = vcmask 64512
        %v830 = vsel %vm829, %v828, -inf
        %831 = vmax.xlane.f32.xlu0 %v830
        %v832 = vpop.xlane.xlu0 %831
        %v833 = vsub.f32 %v828, %v832
        %v834 = vmul.f32 %v833, 1.442695
        %v835 = vpow.pop %v834
        %v836 = vsel %vm829, %v835, 0.0
        %837 = vadd.xlane.f32.xlu0 %v836
        %v838 = vpop.xlane.xlu0 %837
        %v839 = vrcp.pop %v838
        %v840 = vmul.f32 %v835, %v839
        %v842 = vsel %vm829, %v840, 0
        %844 = vmatprep.subr.mxu0 0.0
        %845 = vmatpush1.msra.mxu0 %v722
        %846 = vmatprep.subr.mxu0 0.0
        %847 = vmatpush1.msra.mxu0 0.0
        %848 = vmatprep.subr.mxu0 0.0
        %849 = vmatpush1.msra.mxu0 0.0
        %850 = vmatprep.subr.mxu0 0.0
        %851 = vmatpush1.msra.mxu0 0.0
        %852 = vmatprep.subr.mxu0 0.0
        %853 = vmatpush1.msra.mxu0 0.0
        %854 = vmatprep.subr.mxu0 0.0
        %855 = vmatpush1.msra.mxu0 0.0
        %856 = vmatprep.subr.mxu0 0.0
        %857 = vmatpush1.msra.mxu0 0.0
        %858 = vmatprep.subr.mxu0 0.0
        %859 = vmatpush1.msra.mxu0 0.0
        %860 = vmatprep.subr.mxu0 0.0
        %861 = vmatpush1.msra.mxu0 0.0
        %862 = vmatprep.subr.mxu0 0.0
        %863 = vmatpush1.msra.mxu0 0.0
        %864 = vmatprep.subr.mxu0 0.0
        %865 = vmatpush1.msra.mxu0 0.0
        %866 = vmatprep.subr.mxu0 0.0
        %867 = vmatpush1.msra.mxu0 0.0
        %868 = vmatprep.subr.mxu0 0.0
        %869 = vmatpush1.msra.mxu0 0.0
        %870 = vmatprep.subr.mxu0 0.0
        %871 = vmatpush1.msra.mxu0 0.0
        %872 = vmatprep.subr.mxu0 0.0
        %873 = vmatpush1.msra.mxu0 0.0
        %874 = vmatprep.subr.mxu0 0.0
        %875 = vmatpush1.msra.mxu0 0.0
        %876 = vmatprep.subr.mxu0 0.0
        %877 = vmatpush1.msra.mxu0 0.0
        %878 = vmatprep.subr.mxu0 0.0
        %879 = vmatpush1.msra.mxu0 0.0
        %880 = vmatprep.subr.mxu0 0.0
        %881 = vmatpush1.msra.mxu0 0.0
        %882 = vmatprep.subr.mxu0 0.0
        %883 = vmatpush1.msra.mxu0 0.0
        %884 = vmatprep.subr.mxu0 0.0
        %885 = vmatpush1.msra.mxu0 0.0
        %886 = vmatprep.subr.mxu0 0.0
        %887 = vmatpush1.msra.mxu0 0.0
        %888 = vmatprep.subr.mxu0 0.0
        %889 = vmatpush1.msra.mxu0 0.0
        %890 = vmatprep.subr.mxu0 0.0
        %891 = vmatpush1.msra.mxu0 0.0
        %892 = vmatprep.subr.mxu0 0.0
        %893 = vmatpush1.msra.mxu0 0.0
        %894 = vmatprep.subr.mxu0 0.0
        %895 = vmatpush1.msra.mxu0 0.0
        %896 = vmatprep.subr.mxu0 0.0
        %897 = vmatpush1.msra.mxu0 0.0
        %898 = vmatprep.subr.mxu0 0.0
        %899 = vmatpush1.msra.mxu0 0.0
        %900 = vmatprep.subr.mxu0 0.0
        %901 = vmatpush1.msra.mxu0 0.0
        %902 = vmatprep.subr.mxu0 0.0
        %903 = vmatpush1.msra.mxu0 0.0
        %904 = vmatprep.subr.mxu0 0.0
        %905 = vmatpush1.msra.mxu0 0.0
        %906 = vmatprep.subr.mxu0 0.0
        %907 = vmatpush1.msra.mxu0 0.0
        %908 = vmatprep.mubr.f32.mxu0 0.0
        %909 = vmatmul.mubr.f32.gmra.mrb[0].mxu0 %v842
        %v910 = vpop.f32.mrb[0].mxu0
        %v911 = vadd.f32 0.0, %v910
        %v912 = vpop.f32.mrb[0].mxu0
        %913 = vdwg.mxu0
        %914 = vrot.lane.b32.xlu0 %v736, 96
        %v915 = vpop.permute.xlu0 %914
        %916 = vrot.lane.b32.xlu0 %v745, 96
        %v917 = vpop.permute.xlu0 %916
        %v918 = vsel %vm553, %v915, 0
        %v920 = vsel %vm553, %v917, 0
        %922 = vmatprep.subr.mxu0 0.0
        %923 = vmatpush1.xpose.msra.mxu0 %v920
        %924 = vmatprep.subr.mxu0 0.0
        %925 = vmatpush1.xpose.msra.mxu0 0.0
        %926 = vmatprep.subr.mxu0 0.0
        %927 = vmatpush1.xpose.msra.mxu0 0.0
        %928 = vmatprep.subr.mxu0 0.0
        %929 = vmatpush1.xpose.msra.mxu0 0.0
        %930 = vmatprep.subr.mxu0 0.0
        %931 = vmatpush1.xpose.msra.mxu0 0.0
        %932 = vmatprep.subr.mxu0 0.0
        %933 = vmatpush1.xpose.msra.mxu0 0.0
        %934 = vmatprep.subr.mxu0 0.0
        %935 = vmatpush1.xpose.msra.mxu0 0.0
        %936 = vmatprep.subr.mxu0 0.0
        %937 = vmatpush1.xpose.msra.mxu0 0.0
        %938 = vmatprep.subr.mxu0 0.0
        %939 = vmatpush1.xpose.msra.mxu0 0.0
        %940 = vmatprep.subr.mxu0 0.0
        %941 = vmatpush1.xpose.msra.mxu0 0.0
        %942 = vmatprep.subr.mxu0 0.0
        %943 = vmatpush1.xpose.msra.mxu0 0.0
        %944 = vmatprep.subr.mxu0 0.0
        %945 = vmatpush1.xpose.msra.mxu0 0.0
        %946 = vmatprep.subr.mxu0 0.0
        %947 = vmatpush1.xpose.msra.mxu0 0.0
        %948 = vmatprep.subr.mxu0 0.0
        %949 = vmatpush1.xpose.msra.mxu0 0.0
        %950 = vmatprep.subr.mxu0 0.0
        %951 = vmatpush1.xpose.msra.mxu0 0.0
        %952 = vmatprep.subr.mxu0 0.0
        %953 = vmatpush1.xpose.msra.mxu0 0.0
        %954 = vmatprep.subr.mxu0 0.0
        %955 = vmatpush1.xpose.msra.mxu0 0.0
        %956 = vmatprep.subr.mxu0 0.0
        %957 = vmatpush1.xpose.msra.mxu0 0.0
        %958 = vmatprep.subr.mxu0 0.0
        %959 = vmatpush1.xpose.msra.mxu0 0.0
        %960 = vmatprep.subr.mxu0 0.0
        %961 = vmatpush1.xpose.msra.mxu0 0.0
        %962 = vmatprep.subr.mxu0 0.0
        %963 = vmatpush1.xpose.msra.mxu0 0.0
        %964 = vmatprep.subr.mxu0 0.0
        %965 = vmatpush1.xpose.msra.mxu0 0.0
        %966 = vmatprep.subr.mxu0 0.0
        %967 = vmatpush1.xpose.msra.mxu0 0.0
        %968 = vmatprep.subr.mxu0 0.0
        %969 = vmatpush1.xpose.msra.mxu0 0.0
        %970 = vmatprep.subr.mxu0 0.0
        %971 = vmatpush1.xpose.msra.mxu0 0.0
        %972 = vmatprep.subr.mxu0 0.0
        %973 = vmatpush1.xpose.msra.mxu0 0.0
        %974 = vmatprep.subr.mxu0 0.0
        %975 = vmatpush1.xpose.msra.mxu0 0.0
        %976 = vmatprep.subr.mxu0 0.0
        %977 = vmatpush1.xpose.msra.mxu0 0.0
        %978 = vmatprep.subr.mxu0 0.0
        %979 = vmatpush1.xpose.msra.mxu0 0.0
        %980 = vmatprep.subr.mxu0 0.0
        %981 = vmatpush1.xpose.msra.mxu0 0.0
        %982 = vmatprep.subr.mxu0 0.0
        %983 = vmatpush1.xpose.msra.mxu0 0.0
        %984 = vmatprep.subr.mxu0 0.0
        %985 = vmatpush1.xpose.msra.mxu0 0.0
        %986 = vmatprep.mubr.f32.mxu0 0.0
        %987 = vmatmul.mubr.f32.gmra.mrb[0].mxu0 %v918
        %v988 = vpop.f32.mrb[0].mxu0
        %v989 = vadd.f32 0.0, %v988
        %v990 = vpop.f32.mrb[0].mxu0
        %991 = vdwg.mxu0
        %v992 = vmul.f32 %v989, 0.17677669
        %v993 = vsel %vm750, %v992, -1e+30
        %v994 = vsel %vm829, %v993, -inf
        %995 = vmax.xlane.f32.xlu0 %v994
        %v996 = vpop.xlane.xlu0 %995
        %v997 = vsub.f32 %v993, %v996
        %v998 = vmul.f32 %v997, 1.442695
        %v999 = vpow.pop %v998
        %v1000 = vsel %vm829, %v999, 0.0
        %1001 = vadd.xlane.f32.xlu0 %v1000
        %v1002 = vpop.xlane.xlu0 %1001
        %v1003 = vrcp.pop %v1002
        %v1004 = vmul.f32 %v999, %v1003
        %1006 = vrot.lane.b32.xlu0 %v722, 96
        %v1007 = vpop.permute.xlu0 %1006
        %v1010 = vsel %vm829, %v1004, 0
        %1012 = vmatprep.subr.mxu0 0.0
        %1013 = vmatpush1.msra.mxu0 %v1007
        %1014 = vmatprep.subr.mxu0 0.0
        %1015 = vmatpush1.msra.mxu0 0.0
        %1016 = vmatprep.subr.mxu0 0.0
        %1017 = vmatpush1.msra.mxu0 0.0
        %1018 = vmatprep.subr.mxu0 0.0
        %1019 = vmatpush1.msra.mxu0 0.0
        %1020 = vmatprep.subr.mxu0 0.0
        %1021 = vmatpush1.msra.mxu0 0.0
        %1022 = vmatprep.subr.mxu0 0.0
        %1023 = vmatpush1.msra.mxu0 0.0
        %1024 = vmatprep.subr.mxu0 0.0
        %1025 = vmatpush1.msra.mxu0 0.0
        %1026 = vmatprep.subr.mxu0 0.0
        %1027 = vmatpush1.msra.mxu0 0.0
        %1028 = vmatprep.subr.mxu0 0.0
        %1029 = vmatpush1.msra.mxu0 0.0
        %1030 = vmatprep.subr.mxu0 0.0
        %1031 = vmatpush1.msra.mxu0 0.0
        %1032 = vmatprep.subr.mxu0 0.0
        %1033 = vmatpush1.msra.mxu0 0.0
        %1034 = vmatprep.subr.mxu0 0.0
        %1035 = vmatpush1.msra.mxu0 0.0
        %1036 = vmatprep.subr.mxu0 0.0
        %1037 = vmatpush1.msra.mxu0 0.0
        %1038 = vmatprep.subr.mxu0 0.0
        %1039 = vmatpush1.msra.mxu0 0.0
        %1040 = vmatprep.subr.mxu0 0.0
        %1041 = vmatpush1.msra.mxu0 0.0
        %1042 = vmatprep.subr.mxu0 0.0
        %1043 = vmatpush1.msra.mxu0 0.0
        %1044 = vmatprep.subr.mxu0 0.0
        %1045 = vmatpush1.msra.mxu0 0.0
        %1046 = vmatprep.subr.mxu0 0.0
        %1047 = vmatpush1.msra.mxu0 0.0
        %1048 = vmatprep.subr.mxu0 0.0
        %1049 = vmatpush1.msra.mxu0 0.0
        %1050 = vmatprep.subr.mxu0 0.0
        %1051 = vmatpush1.msra.mxu0 0.0
        %1052 = vmatprep.subr.mxu0 0.0
        %1053 = vmatpush1.msra.mxu0 0.0
        %1054 = vmatprep.subr.mxu0 0.0
        %1055 = vmatpush1.msra.mxu0 0.0
        %1056 = vmatprep.subr.mxu0 0.0
        %1057 = vmatpush1.msra.mxu0 0.0
        %1058 = vmatprep.subr.mxu0 0.0
        %1059 = vmatpush1.msra.mxu0 0.0
        %1060 = vmatprep.subr.mxu0 0.0
        %1061 = vmatpush1.msra.mxu0 0.0
        %1062 = vmatprep.subr.mxu0 0.0
        %1063 = vmatpush1.msra.mxu0 0.0
        %1064 = vmatprep.subr.mxu0 0.0
        %1065 = vmatpush1.msra.mxu0 0.0
        %1066 = vmatprep.subr.mxu0 0.0
        %1067 = vmatpush1.msra.mxu0 0.0
        %1068 = vmatprep.subr.mxu0 0.0
        %1069 = vmatpush1.msra.mxu0 0.0
        %1070 = vmatprep.subr.mxu0 0.0
        %1071 = vmatpush1.msra.mxu0 0.0
        %1072 = vmatprep.subr.mxu0 0.0
        %1073 = vmatpush1.msra.mxu0 0.0
        %1074 = vmatprep.subr.mxu0 0.0
        %1075 = vmatpush1.msra.mxu0 0.0
        %1076 = vmatprep.mubr.f32.mxu0 0.0
        %1077 = vmatmul.mubr.f32.gmra.mrb[0].mxu0 %v1010
        %v1078 = vpop.f32.mrb[0].mxu0
        %v1079 = vadd.f32 0.0, %v1078
        %v1080 = vpop.f32.mrb[0].mxu0
        %1081 = vdwg.mxu0
        %1082 = vrot.lane.b32.xlu0 %v736, 64
        %v1083 = vpop.permute.xlu0 %1082
        %1084 = vrot.lane.b32.xlu0 %v745, 64
        %v1085 = vpop.permute.xlu0 %1084
        %v1086 = vsel %vm553, %v1083, 0
        %v1088 = vsel %vm553, %v1085, 0
        %1090 = vmatprep.subr.mxu0 0.0
        %1091 = vmatpush1.xpose.msra.mxu0 %v1088
        %1092 = vmatprep.subr.mxu0 0.0
        %1093 = vmatpush1.xpose.msra.mxu0 0.0
        %1094 = vmatprep.subr.mxu0 0.0
        %1095 = vmatpush1.xpose.msra.mxu0 0.0
        %1096 = vmatprep.subr.mxu0 0.0
        %1097 = vmatpush1.xpose.msra.mxu0 0.0
        %1098 = vmatprep.subr.mxu0 0.0
        %1099 = vmatpush1.xpose.msra.mxu0 0.0
        %1100 = vmatprep.subr.mxu0 0.0
        %1101 = vmatpush1.xpose.msra.mxu0 0.0
        %1102 = vmatprep.subr.mxu0 0.0
        %1103 = vmatpush1.xpose.msra.mxu0 0.0
        %1104 = vmatprep.subr.mxu0 0.0
        %1105 = vmatpush1.xpose.msra.mxu0 0.0
        %1106 = vmatprep.subr.mxu0 0.0
        %1107 = vmatpush1.xpose.msra.mxu0 0.0
        %1108 = vmatprep.subr.mxu0 0.0
        %1109 = vmatpush1.xpose.msra.mxu0 0.0
        %1110 = vmatprep.subr.mxu0 0.0
        %1111 = vmatpush1.xpose.msra.mxu0 0.0
        %1112 = vmatprep.subr.mxu0 0.0
        %1113 = vmatpush1.xpose.msra.mxu0 0.0
        %1114 = vmatprep.subr.mxu0 0.0
        %1115 = vmatpush1.xpose.msra.mxu0 0.0
        %1116 = vmatprep.subr.mxu0 0.0
        %1117 = vmatpush1.xpose.msra.mxu0 0.0
        %1118 = vmatprep.subr.mxu0 0.0
        %1119 = vmatpush1.xpose.msra.mxu0 0.0
        %1120 = vmatprep.subr.mxu0 0.0
        %1121 = vmatpush1.xpose.msra.mxu0 0.0
        %1122 = vmatprep.subr.mxu0 0.0
        %1123 = vmatpush1.xpose.msra.mxu0 0.0
        %1124 = vmatprep.subr.mxu0 0.0
        %1125 = vmatpush1.xpose.msra.mxu0 0.0
        %1126 = vmatprep.subr.mxu0 0.0
        %1127 = vmatpush1.xpose.msra.mxu0 0.0
        %1128 = vmatprep.subr.mxu0 0.0
        %1129 = vmatpush1.xpose.msra.mxu0 0.0
        %1130 = vmatprep.subr.mxu0 0.0
        %1131 = vmatpush1.xpose.msra.mxu0 0.0
        %1132 = vmatprep.subr.mxu0 0.0
        %1133 = vmatpush1.xpose.msra.mxu0 0.0
        %1134 = vmatprep.subr.mxu0 0.0
        %1135 = vmatpush1.xpose.msra.mxu0 0.0
        %1136 = vmatprep.subr.mxu0 0.0
        %1137 = vmatpush1.xpose.msra.mxu0 0.0
        %1138 = vmatprep.subr.mxu0 0.0
        %1139 = vmatpush1.xpose.msra.mxu0 0.0
        %1140 = vmatprep.subr.mxu0 0.0
        %1141 = vmatpush1.xpose.msra.mxu0 0.0
        %1142 = vmatprep.subr.mxu0 0.0
        %1143 = vmatpush1.xpose.msra.mxu0 0.0
        %1144 = vmatprep.subr.mxu0 0.0
        %1145 = vmatpush1.xpose.msra.mxu0 0.0
        %1146 = vmatprep.subr.mxu0 0.0
        %1147 = vmatpush1.xpose.msra.mxu0 0.0
        %1148 = vmatprep.subr.mxu0 0.0
        %1149 = vmatpush1.xpose.msra.mxu0 0.0
        %1150 = vmatprep.subr.mxu0 0.0
        %1151 = vmatpush1.xpose.msra.mxu0 0.0
        %1152 = vmatprep.subr.mxu0 0.0
        %1153 = vmatpush1.xpose.msra.mxu0 0.0
        %1154 = vmatprep.mubr.f32.mxu0 0.0
        %1155 = vmatmul.mubr.f32.gmra.mrb[0].mxu0 %v1086
        %v1156 = vpop.f32.mrb[0].mxu0
        %v1157 = vadd.f32 0.0, %v1156
        %v1158 = vpop.f32.mrb[0].mxu0
        %1159 = vdwg.mxu0
        %v1160 = vmul.f32 %v1157, 0.17677669
        %v1161 = vsel %vm750, %v1160, -1e+30
        %v1162 = vsel %vm829, %v1161, -inf
        %1163 = vmax.xlane.f32.xlu0 %v1162
        %v1164 = vpop.xlane.xlu0 %1163
        %v1165 = vsub.f32 %v1161, %v1164
        %v1166 = vmul.f32 %v1165, 1.442695
        %v1167 = vpow.pop %v1166
        %v1168 = vsel %vm829, %v1167, 0.0
        %1169 = vadd.xlane.f32.xlu0 %v1168
        %v1170 = vpop.xlane.xlu0 %1169
        %v1171 = vrcp.pop %v1170
        %v1172 = vmul.f32 %v1167, %v1171
        %1173 = vrot.lane.b32.xlu0 %v722, 64
        %v1174 = vpop.permute.xlu0 %1173
        %v1177 = vsel %vm829, %v1172, 0
        %1179 = vmatprep.subr.mxu0 0.0
        %1180 = vmatpush1.msra.mxu0 %v1174
        %1181 = vmatprep.subr.mxu0 0.0
        %1182 = vmatpush1.msra.mxu0 0.0
        %1183 = vmatprep.subr.mxu0 0.0
        %1184 = vmatpush1.msra.mxu0 0.0
        %1185 = vmatprep.subr.mxu0 0.0
        %1186 = vmatpush1.msra.mxu0 0.0
        %1187 = vmatprep.subr.mxu0 0.0
        %1188 = vmatpush1.msra.mxu0 0.0
        %1189 = vmatprep.subr.mxu0 0.0
        %1190 = vmatpush1.msra.mxu0 0.0
        %1191 = vmatprep.subr.mxu0 0.0
        %1192 = vmatpush1.msra.mxu0 0.0
        %1193 = vmatprep.subr.mxu0 0.0
        %1194 = vmatpush1.msra.mxu0 0.0
        %1195 = vmatprep.subr.mxu0 0.0
        %1196 = vmatpush1.msra.mxu0 0.0
        %1197 = vmatprep.subr.mxu0 0.0
        %1198 = vmatpush1.msra.mxu0 0.0
        %1199 = vmatprep.subr.mxu0 0.0
        %1200 = vmatpush1.msra.mxu0 0.0
        %1201 = vmatprep.subr.mxu0 0.0
        %1202 = vmatpush1.msra.mxu0 0.0
        %1203 = vmatprep.subr.mxu0 0.0
        %1204 = vmatpush1.msra.mxu0 0.0
        %1205 = vmatprep.subr.mxu0 0.0
        %1206 = vmatpush1.msra.mxu0 0.0
        %1207 = vmatprep.subr.mxu0 0.0
        %1208 = vmatpush1.msra.mxu0 0.0
        %1209 = vmatprep.subr.mxu0 0.0
        %1210 = vmatpush1.msra.mxu0 0.0
        %1211 = vmatprep.subr.mxu0 0.0
        %1212 = vmatpush1.msra.mxu0 0.0
        %1213 = vmatprep.subr.mxu0 0.0
        %1214 = vmatpush1.msra.mxu0 0.0
        %1215 = vmatprep.subr.mxu0 0.0
        %1216 = vmatpush1.msra.mxu0 0.0
        %1217 = vmatprep.subr.mxu0 0.0
        %1218 = vmatpush1.msra.mxu0 0.0
        %1219 = vmatprep.subr.mxu0 0.0
        %1220 = vmatpush1.msra.mxu0 0.0
        %1221 = vmatprep.subr.mxu0 0.0
        %1222 = vmatpush1.msra.mxu0 0.0
        %1223 = vmatprep.subr.mxu0 0.0
        %1224 = vmatpush1.msra.mxu0 0.0
        %1225 = vmatprep.subr.mxu0 0.0
        %1226 = vmatpush1.msra.mxu0 0.0
        %1227 = vmatprep.subr.mxu0 0.0
        %1228 = vmatpush1.msra.mxu0 0.0
        %1229 = vmatprep.subr.mxu0 0.0
        %1230 = vmatpush1.msra.mxu0 0.0
        %1231 = vmatprep.subr.mxu0 0.0
        %1232 = vmatpush1.msra.mxu0 0.0
        %1233 = vmatprep.subr.mxu0 0.0
        %1234 = vmatpush1.msra.mxu0 0.0
        %1235 = vmatprep.subr.mxu0 0.0
        %1236 = vmatpush1.msra.mxu0 0.0
        %1237 = vmatprep.subr.mxu0 0.0
        %1238 = vmatpush1.msra.mxu0 0.0
        %1239 = vmatprep.subr.mxu0 0.0
        %1240 = vmatpush1.msra.mxu0 0.0
        %1241 = vmatprep.subr.mxu0 0.0
        %1242 = vmatpush1.msra.mxu0 0.0
        %1243 = vmatprep.mubr.f32.mxu0 0.0
        %1244 = vmatmul.mubr.f32.gmra.mrb[0].mxu0 %v1177
        %v1245 = vpop.f32.mrb[0].mxu0
        %v1246 = vadd.f32 0.0, %v1245
        %v1247 = vpop.f32.mrb[0].mxu0
        %1248 = vdwg.mxu0
        %1249 = vrot.lane.b32.xlu0 %v736, 32
        %v1250 = vpop.permute.xlu0 %1249
        %1251 = vrot.lane.b32.xlu0 %v745, 32
        %v1252 = vpop.permute.xlu0 %1251
        %v1253 = vsel %vm553, %v1250, 0
        %v1255 = vsel %vm553, %v1252, 0
        %1257 = vmatprep.subr.mxu0 0.0
        %1258 = vmatpush1.xpose.msra.mxu0 %v1255
        %1259 = vmatprep.subr.mxu0 0.0
        %1260 = vmatpush1.xpose.msra.mxu0 0.0
        %1261 = vmatprep.subr.mxu0 0.0
        %1262 = vmatpush1.xpose.msra.mxu0 0.0
        %1263 = vmatprep.subr.mxu0 0.0
        %1264 = vmatpush1.xpose.msra.mxu0 0.0
        %1265 = vmatprep.subr.mxu0 0.0
        %1266 = vmatpush1.xpose.msra.mxu0 0.0
        %1267 = vmatprep.subr.mxu0 0.0
        %1268 = vmatpush1.xpose.msra.mxu0 0.0
        %1269 = vmatprep.subr.mxu0 0.0
        %1270 = vmatpush1.xpose.msra.mxu0 0.0
        %1271 = vmatprep.subr.mxu0 0.0
        %1272 = vmatpush1.xpose.msra.mxu0 0.0
        %1273 = vmatprep.subr.mxu0 0.0
        %1274 = vmatpush1.xpose.msra.mxu0 0.0
        %1275 = vmatprep.subr.mxu0 0.0
        %1276 = vmatpush1.xpose.msra.mxu0 0.0
        %1277 = vmatprep.subr.mxu0 0.0
        %1278 = vmatpush1.xpose.msra.mxu0 0.0
        %1279 = vmatprep.subr.mxu0 0.0
        %1280 = vmatpush1.xpose.msra.mxu0 0.0
        %1281 = vmatprep.subr.mxu0 0.0
        %1282 = vmatpush1.xpose.msra.mxu0 0.0
        %1283 = vmatprep.subr.mxu0 0.0
        %1284 = vmatpush1.xpose.msra.mxu0 0.0
        %1285 = vmatprep.subr.mxu0 0.0
        %1286 = vmatpush1.xpose.msra.mxu0 0.0
        %1287 = vmatprep.subr.mxu0 0.0
        %1288 = vmatpush1.xpose.msra.mxu0 0.0
        %1289 = vmatprep.subr.mxu0 0.0
        %1290 = vmatpush1.xpose.msra.mxu0 0.0
        %1291 = vmatprep.subr.mxu0 0.0
        %1292 = vmatpush1.xpose.msra.mxu0 0.0
        %1293 = vmatprep.subr.mxu0 0.0
        %1294 = vmatpush1.xpose.msra.mxu0 0.0
        %1295 = vmatprep.subr.mxu0 0.0
        %1296 = vmatpush1.xpose.msra.mxu0 0.0
        %1297 = vmatprep.subr.mxu0 0.0
        %1298 = vmatpush1.xpose.msra.mxu0 0.0
        %1299 = vmatprep.subr.mxu0 0.0
        %1300 = vmatpush1.xpose.msra.mxu0 0.0
        %1301 = vmatprep.subr.mxu0 0.0
        %1302 = vmatpush1.xpose.msra.mxu0 0.0
        %1303 = vmatprep.subr.mxu0 0.0
        %1304 = vmatpush1.xpose.msra.mxu0 0.0
        %1305 = vmatprep.subr.mxu0 0.0
        %1306 = vmatpush1.xpose.msra.mxu0 0.0
        %1307 = vmatprep.subr.mxu0 0.0
        %1308 = vmatpush1.xpose.msra.mxu0 0.0
        %1309 = vmatprep.subr.mxu0 0.0
        %1310 = vmatpush1.xpose.msra.mxu0 0.0
        %1311 = vmatprep.subr.mxu0 0.0
        %1312 = vmatpush1.xpose.msra.mxu0 0.0
        %1313 = vmatprep.subr.mxu0 0.0
        %1314 = vmatpush1.xpose.msra.mxu0 0.0
        %1315 = vmatprep.subr.mxu0 0.0
        %1316 = vmatpush1.xpose.msra.mxu0 0.0
        %1317 = vmatprep.subr.mxu0 0.0
        %1318 = vmatpush1.xpose.msra.mxu0 0.0
        %1319 = vmatprep.subr.mxu0 0.0
        %1320 = vmatpush1.xpose.msra.mxu0 0.0
        %1321 = vmatprep.mubr.f32.mxu0 0.0
        %1322 = vmatmul.mubr.f32.gmra.mrb[0].mxu0 %v1253
        %v1323 = vpop.f32.mrb[0].mxu0
        %v1324 = vadd.f32 0.0, %v1323
        %v1325 = vpop.f32.mrb[0].mxu0
        %1326 = vdwg.mxu0
        %v1327 = vmul.f32 %v1324, 0.17677669
        %v1328 = vsel %vm750, %v1327, -1e+30
        %v1329 = vsel %vm829, %v1328, -inf
        %1330 = vmax.xlane.f32.xlu0 %v1329
        %v1331 = vpop.xlane.xlu0 %1330
        %v1332 = vsub.f32 %v1328, %v1331
        %v1333 = vmul.f32 %v1332, 1.442695
        %v1334 = vpow.pop %v1333
        %v1335 = vsel %vm829, %v1334, 0.0
        %1336 = vadd.xlane.f32.xlu0 %v1335
        %v1337 = vpop.xlane.xlu0 %1336
        %v1338 = vrcp.pop %v1337
        %v1339 = vmul.f32 %v1334, %v1338
        %1340 = vrot.lane.b32.xlu0 %v722, 32
        %v1341 = vpop.permute.xlu0 %1340
        %v1344 = vsel %vm829, %v1339, 0
        %1346 = vmatprep.subr.mxu0 0.0
        %1347 = vmatpush1.msra.mxu0 %v1341
        %1348 = vmatprep.subr.mxu0 0.0
        %1349 = vmatpush1.msra.mxu0 0.0
        %1350 = vmatprep.subr.mxu0 0.0
        %1351 = vmatpush1.msra.mxu0 0.0
        %1352 = vmatprep.subr.mxu0 0.0
        %1353 = vmatpush1.msra.mxu0 0.0
        %1354 = vmatprep.subr.mxu0 0.0
        %1355 = vmatpush1.msra.mxu0 0.0
        %1356 = vmatprep.subr.mxu0 0.0
        %1357 = vmatpush1.msra.mxu0 0.0
        %1358 = vmatprep.subr.mxu0 0.0
        %1359 = vmatpush1.msra.mxu0 0.0
        %1360 = vmatprep.subr.mxu0 0.0
        %1361 = vmatpush1.msra.mxu0 0.0
        %1362 = vmatprep.subr.mxu0 0.0
        %1363 = vmatpush1.msra.mxu0 0.0
        %1364 = vmatprep.subr.mxu0 0.0
        %1365 = vmatpush1.msra.mxu0 0.0
        %1366 = vmatprep.subr.mxu0 0.0
        %1367 = vmatpush1.msra.mxu0 0.0
        %1368 = vmatprep.subr.mxu0 0.0
        %1369 = vmatpush1.msra.mxu0 0.0
        %1370 = vmatprep.subr.mxu0 0.0
        %1371 = vmatpush1.msra.mxu0 0.0
        %1372 = vmatprep.subr.mxu0 0.0
        %1373 = vmatpush1.msra.mxu0 0.0
        %1374 = vmatprep.subr.mxu0 0.0
        %1375 = vmatpush1.msra.mxu0 0.0
        %1376 = vmatprep.subr.mxu0 0.0
        %1377 = vmatpush1.msra.mxu0 0.0
        %1378 = vmatprep.subr.mxu0 0.0
        %1379 = vmatpush1.msra.mxu0 0.0
        %1380 = vmatprep.subr.mxu0 0.0
        %1381 = vmatpush1.msra.mxu0 0.0
        %1382 = vmatprep.subr.mxu0 0.0
        %1383 = vmatpush1.msra.mxu0 0.0
        %1384 = vmatprep.subr.mxu0 0.0
        %1385 = vmatpush1.msra.mxu0 0.0
        %1386 = vmatprep.subr.mxu0 0.0
        %1387 = vmatpush1.msra.mxu0 0.0
        %1388 = vmatprep.subr.mxu0 0.0
        %1389 = vmatpush1.msra.mxu0 0.0
        %1390 = vmatprep.subr.mxu0 0.0
        %1391 = vmatpush1.msra.mxu0 0.0
        %1392 = vmatprep.subr.mxu0 0.0
        %1393 = vmatpush1.msra.mxu0 0.0
        %1394 = vmatprep.subr.mxu0 0.0
        %1395 = vmatpush1.msra.mxu0 0.0
        %1396 = vmatprep.subr.mxu0 0.0
        %1397 = vmatpush1.msra.mxu0 0.0
        %1398 = vmatprep.subr.mxu0 0.0
        %1399 = vmatpush1.msra.mxu0 0.0
        %1400 = vmatprep.subr.mxu0 0.0
        %1401 = vmatpush1.msra.mxu0 0.0
        %1402 = vmatprep.subr.mxu0 0.0
        %1403 = vmatpush1.msra.mxu0 0.0
        %1404 = vmatprep.subr.mxu0 0.0
        %1405 = vmatpush1.msra.mxu0 0.0
        %1406 = vmatprep.subr.mxu0 0.0
        %1407 = vmatpush1.msra.mxu0 0.0
        %1408 = vmatprep.subr.mxu0 0.0
        %1409 = vmatpush1.msra.mxu0 0.0
        %1410 = vmatprep.mubr.f32.mxu0 0.0
        %1411 = vmatmul.mubr.f32.gmra.mrb[0].mxu0 %v1344
        %v1412 = vpop.f32.mrb[0].mxu0
        %v1413 = vadd.f32 0.0, %v1412
        %v1414 = vpop.f32.mrb[0].mxu0
        %1415 = vdwg.mxu0
        %1417 = vrot.lane.b32.xlu0 %v1079, 32
        %v1418 = vpop.permute.xlu0 %1417
        %1421 = vrot.lane.b32.xlu0 %v1246, 64
        %v1422 = vpop.permute.xlu0 %1421
        %1425 = vrot.lane.b32.xlu0 %v1413, 96
        %v1426 = vpop.permute.xlu0 %1425
        %v1428 = vsel %vm553, %v911, %v1418
        %vm1429 = vcmask 523264
        %v1430 = vsel %vm1429, %v1428, %v1422
        %vm1431 = vcmask 785408
        %v1432 = vsel %vm1431, %v1430, %v1426
        %v1433 = vld [vmem:[%s6] sm:$0xff]
        %v1434 = vld [vmem:[%s6 + $0x8] sm:$0xff]
        %v1435 = vld [vmem:[%s6 + $0x10] sm:$0xff]
        %v1436 = vld [vmem:[%s6 + $0x18] sm:$0xff]
        %v1437 = vld [vmem:[%s6 + $0x20] sm:$0xff]
        %v1438 = vld [vmem:[%s6 + $0x28] sm:$0xff]
        %v1439 = vld [vmem:[%s6 + $0x30] sm:$0xff]
        %v1440 = vld [vmem:[%s6 + $0x38] sm:$0xff]
        %v1441 = vld [vmem:[%s6 + $0x40] sm:$0xff]
        %v1442 = vld [vmem:[%s6 + $0x48] sm:$0xff]
        %v1443 = vld [vmem:[%s6 + $0x50] sm:$0xff]
        %v1444 = vld [vmem:[%s6 + $0x58] sm:$0xff]
        %v1445 = vld [vmem:[%s6 + $0x60] sm:$0xff]
        %v1446 = vld [vmem:[%s6 + $0x68] sm:$0xff]
        %v1447 = vld [vmem:[%s6 + $0x70] sm:$0xff]
        %v1448 = vld [vmem:[%s6 + $0x78] sm:$0xff]
        %v1449 = vld [vmem:[%s7] sm:$0x1]
        %v1451 = vlaneseq
        %v1452 = vshrl.u32 %v1451, 7
        %v1453 = vsub.s32 0, %v1452
        %v1454 = vrot.slane %v1449, %v1453
        %1456 = vmatprep.subr.mxu0 0.0
        %1457 = vmatpush1.msra.mxu0 %v1433
        %1458 = vmatprep.subr.mxu0 0.0
        %1459 = vmatpush1.msra.mxu0 %v1434
        %1460 = vmatprep.subr.mxu0 0.0
        %1461 = vmatpush1.msra.mxu0 %v1435
        %1462 = vmatprep.subr.mxu0 0.0
        %1463 = vmatpush1.msra.mxu0 %v1436
        %1464 = vmatprep.subr.mxu0 0.0
        %1465 = vmatpush1.msra.mxu0 %v1437
        %1466 = vmatprep.subr.mxu0 0.0
        %1467 = vmatpush1.msra.mxu0 %v1438
        %1468 = vmatprep.subr.mxu0 0.0
        %1469 = vmatpush1.msra.mxu0 %v1439
        %1470 = vmatprep.subr.mxu0 0.0
        %1471 = vmatpush1.msra.mxu0 %v1440
        %1472 = vmatprep.subr.mxu0 0.0
        %1473 = vmatpush1.msra.mxu0 %v1441
        %1474 = vmatprep.subr.mxu0 0.0
        %1475 = vmatpush1.msra.mxu0 %v1442
        %1476 = vmatprep.subr.mxu0 0.0
        %1477 = vmatpush1.msra.mxu0 %v1443
        %1478 = vmatprep.subr.mxu0 0.0
        %1479 = vmatpush1.msra.mxu0 %v1444
        %1480 = vmatprep.subr.mxu0 0.0
        %1481 = vmatpush1.msra.mxu0 %v1445
        %1482 = vmatprep.subr.mxu0 0.0
        %1483 = vmatpush1.msra.mxu0 %v1446
        %1484 = vmatprep.subr.mxu0 0.0
        %1485 = vmatpush1.msra.mxu0 %v1447
        %1486 = vmatprep.subr.mxu0 0.0
        %1487 = vmatpush1.msra.mxu0 %v1448
        %1488 = vmatprep.subr.mxu0 0.0
        %1489 = vmatpush1.msra.mxu0 0.0
        %1490 = vmatprep.subr.mxu0 0.0
        %1491 = vmatpush1.msra.mxu0 0.0
        %1492 = vmatprep.subr.mxu0 0.0
        %1493 = vmatpush1.msra.mxu0 0.0
        %1494 = vmatprep.subr.mxu0 0.0
        %1495 = vmatpush1.msra.mxu0 0.0
        %1496 = vmatprep.subr.mxu0 0.0
        %1497 = vmatpush1.msra.mxu0 0.0
        %1498 = vmatprep.subr.mxu0 0.0
        %1499 = vmatpush1.msra.mxu0 0.0
        %1500 = vmatprep.subr.mxu0 0.0
        %1501 = vmatpush1.msra.mxu0 0.0
        %1502 = vmatprep.subr.mxu0 0.0
        %1503 = vmatpush1.msra.mxu0 0.0
        %1504 = vmatprep.subr.mxu0 0.0
        %1505 = vmatpush1.msra.mxu0 0.0
        %1506 = vmatprep.subr.mxu0 0.0
        %1507 = vmatpush1.msra.mxu0 0.0
        %1508 = vmatprep.subr.mxu0 0.0
        %1509 = vmatpush1.msra.mxu0 0.0
        %1510 = vmatprep.subr.mxu0 0.0
        %1511 = vmatpush1.msra.mxu0 0.0
        %1512 = vmatprep.subr.mxu0 0.0
        %1513 = vmatpush1.msra.mxu0 0.0
        %1514 = vmatprep.subr.mxu0 0.0
        %1515 = vmatpush1.msra.mxu0 0.0
        %1516 = vmatprep.subr.mxu0 0.0
        %1517 = vmatpush1.msra.mxu0 0.0
        %1518 = vmatprep.subr.mxu0 0.0
        %1519 = vmatpush1.msra.mxu0 0.0
        %1520 = vmatprep.mubr.f32.mxu0 0.0
        %1521 = vmatmul.mubr.f32.gmra.mrb[0].mxu0 %v1432
        %v1522 = vpop.f32.mrb[0].mxu0
        %v1523 = vadd.f32 %v1454, %v1522
        %v1524 = vpop.f32.mrb[0].mxu0
        %1525 = vdwg.mxu0
        %v1526 = vadd.f32 %v568, %v1523
        %v1527 = vmul.f32 %v1526, %v1526
        %v1528 = vsel %vm553, %v1527, 0.0
        %1529 = vadd.xlane.f32.xlu0 %v1528
        %v1530 = vpop.xlane.xlu0 %1529
        %v1531 = vmul.f32 %v1530, %v557
        %v1532 = vadd.f32 %v1531, 1e-08
        %v1533 = vrsqrt.pop %v1532
        %v1534 = vmul.f32 %v1526, %v1533
        %v1535 = vmul.f32 %v1534, %v566
        %v1536 = vld [vmem:[%s8] sm:$0xff]
        %v1537 = vld [vmem:[%s8 + $0x8] sm:$0xff]
        %v1538 = vld [vmem:[%s8 + $0x10] sm:$0xff]
        %v1539 = vld [vmem:[%s8 + $0x18] sm:$0xff]
        %v1540 = vld [vmem:[%s9] sm:$0x1]
        %v1542 = vlaneseq
        %v1543 = vshrl.u32 %v1542, 7
        %v1544 = vsub.s32 0, %v1543
        %v1545 = vrot.slane %v1540, %v1544
        %v1548 = vsel %vm553, %v1535, 0
        %1550 = vmatprep.subr.mxu0 0.0
        %1551 = vmatpush1.msra.mxu0 %v1536
        %1552 = vmatprep.subr.mxu0 0.0
        %1553 = vmatpush1.msra.mxu0 %v1537
        %1554 = vmatprep.subr.mxu0 0.0
        %1555 = vmatpush1.msra.mxu0 %v1538
        %1556 = vmatprep.subr.mxu0 0.0
        %1557 = vmatpush1.msra.mxu0 %v1539
        %1558 = vmatprep.subr.mxu0 0.0
        %1559 = vmatpush1.msra.mxu0 0.0
        %1560 = vmatprep.subr.mxu0 0.0
        %1561 = vmatpush1.msra.mxu0 0.0
        %1562 = vmatprep.subr.mxu0 0.0
        %1563 = vmatpush1.msra.mxu0 0.0
        %1564 = vmatprep.subr.mxu0 0.0
        %1565 = vmatpush1.msra.mxu0 0.0
        %1566 = vmatprep.subr.mxu0 0.0
        %1567 = vmatpush1.msra.mxu0 0.0
        %1568 = vmatprep.subr.mxu0 0.0
        %1569 = vmatpush1.msra.mxu0 0.0
        %1570 = vmatprep.subr.mxu0 0.0
        %1571 = vmatpush1.msra.mxu0 0.0
        %1572 = vmatprep.subr.mxu0 0.0
        %1573 = vmatpush1.msra.mxu0 0.0
        %1574 = vmatprep.subr.mxu0 0.0
        %1575 = vmatpush1.msra.mxu0 0.0
        %1576 = vmatprep.subr.mxu0 0.0
        %1577 = vmatpush1.msra.mxu0 0.0
        %1578 = vmatprep.subr.mxu0 0.0
        %1579 = vmatpush1.msra.mxu0 0.0
        %1580 = vmatprep.subr.mxu0 0.0
        %1581 = vmatpush1.msra.mxu0 0.0
        %1582 = vmatprep.subr.mxu0 0.0
        %1583 = vmatpush1.msra.mxu0 0.0
        %1584 = vmatprep.subr.mxu0 0.0
        %1585 = vmatpush1.msra.mxu0 0.0
        %1586 = vmatprep.subr.mxu0 0.0
        %1587 = vmatpush1.msra.mxu0 0.0
        %1588 = vmatprep.subr.mxu0 0.0
        %1589 = vmatpush1.msra.mxu0 0.0
        %1590 = vmatprep.subr.mxu0 0.0
        %1591 = vmatpush1.msra.mxu0 0.0
        %1592 = vmatprep.subr.mxu0 0.0
        %1593 = vmatpush1.msra.mxu0 0.0
        %1594 = vmatprep.subr.mxu0 0.0
        %1595 = vmatpush1.msra.mxu0 0.0
        %1596 = vmatprep.subr.mxu0 0.0
        %1597 = vmatpush1.msra.mxu0 0.0
        %1598 = vmatprep.subr.mxu0 0.0
        %1599 = vmatpush1.msra.mxu0 0.0
        %1600 = vmatprep.subr.mxu0 0.0
        %1601 = vmatpush1.msra.mxu0 0.0
        %1602 = vmatprep.subr.mxu0 0.0
        %1603 = vmatpush1.msra.mxu0 0.0
        %1604 = vmatprep.subr.mxu0 0.0
        %1605 = vmatpush1.msra.mxu0 0.0
        %1606 = vmatprep.subr.mxu0 0.0
        %1607 = vmatpush1.msra.mxu0 0.0
        %1608 = vmatprep.subr.mxu0 0.0
        %1609 = vmatpush1.msra.mxu0 0.0
        %1610 = vmatprep.subr.mxu0 0.0
        %1611 = vmatpush1.msra.mxu0 0.0
        %1612 = vmatprep.subr.mxu0 0.0
        %1613 = vmatpush1.msra.mxu0 0.0
        %1614 = vmatprep.mubr.f32.mxu0 0.0
        %1615 = vmatmul.mubr.f32.gmra.mrb[0].mxu0 %v1548
        %v1616 = vpop.f32.mrb[0].mxu0
        %v1617 = vadd.f32 %v1545, %v1616
        %v1618 = vpop.f32.mrb[0].mxu0
        %1619 = vdwg.mxu0
        %v1620 = vld [vmem:[%s10] sm:$0xff]
        %v1621 = vld [vmem:[%s10 + $0x8] sm:$0xff]
        %v1622 = vld [vmem:[%s10 + $0x10] sm:$0xff]
        %v1623 = vld [vmem:[%s10 + $0x18] sm:$0xff]
        %v1624 = vld [vmem:[%s11] sm:$0x1]
        %v1626 = vlaneseq
        %v1627 = vshrl.u32 %v1626, 7
        %v1628 = vsub.s32 0, %v1627
        %v1629 = vrot.slane %v1624, %v1628
        %v1632 = vsel %vm553, %v1617, 0
        %1634 = vmatprep.subr.mxu0 0.0
        %1635 = vmatpush1.msra.mxu0 %v1620
        %1636 = vmatprep.subr.mxu0 0.0
        %1637 = vmatpush1.msra.mxu0 %v1621
        %1638 = vmatprep.subr.mxu0 0.0
        %1639 = vmatpush1.msra.mxu0 %v1622
        %1640 = vmatprep.subr.mxu0 0.0
        %1641 = vmatpush1.msra.mxu0 %v1623
        %1642 = vmatprep.subr.mxu0 0.0
        %1643 = vmatpush1.msra.mxu0 0.0
        %1644 = vmatprep.subr.mxu0 0.0
        %1645 = vmatpush1.msra.mxu0 0.0
        %1646 = vmatprep.subr.mxu0 0.0
        %1647 = vmatpush1.msra.mxu0 0.0
        %1648 = vmatprep.subr.mxu0 0.0
        %1649 = vmatpush1.msra.mxu0 0.0
        %1650 = vmatprep.subr.mxu0 0.0
        %1651 = vmatpush1.msra.mxu0 0.0
        %1652 = vmatprep.subr.mxu0 0.0
        %1653 = vmatpush1.msra.mxu0 0.0
        %1654 = vmatprep.subr.mxu0 0.0
        %1655 = vmatpush1.msra.mxu0 0.0
        %1656 = vmatprep.subr.mxu0 0.0
        %1657 = vmatpush1.msra.mxu0 0.0
        %1658 = vmatprep.subr.mxu0 0.0
        %1659 = vmatpush1.msra.mxu0 0.0
        %1660 = vmatprep.subr.mxu0 0.0
        %1661 = vmatpush1.msra.mxu0 0.0
        %1662 = vmatprep.subr.mxu0 0.0
        %1663 = vmatpush1.msra.mxu0 0.0
        %1664 = vmatprep.subr.mxu0 0.0
        %1665 = vmatpush1.msra.mxu0 0.0
        %1666 = vmatprep.subr.mxu0 0.0
        %1667 = vmatpush1.msra.mxu0 0.0
        %1668 = vmatprep.subr.mxu0 0.0
        %1669 = vmatpush1.msra.mxu0 0.0
        %1670 = vmatprep.subr.mxu0 0.0
        %1671 = vmatpush1.msra.mxu0 0.0
        %1672 = vmatprep.subr.mxu0 0.0
        %1673 = vmatpush1.msra.mxu0 0.0
        %1674 = vmatprep.subr.mxu0 0.0
        %1675 = vmatpush1.msra.mxu0 0.0
        %1676 = vmatprep.subr.mxu0 0.0
        %1677 = vmatpush1.msra.mxu0 0.0
        %1678 = vmatprep.subr.mxu0 0.0
        %1679 = vmatpush1.msra.mxu0 0.0
        %1680 = vmatprep.subr.mxu0 0.0
        %1681 = vmatpush1.msra.mxu0 0.0
        %1682 = vmatprep.subr.mxu0 0.0
        %1683 = vmatpush1.msra.mxu0 0.0
        %1684 = vmatprep.subr.mxu0 0.0
        %1685 = vmatpush1.msra.mxu0 0.0
        %1686 = vmatprep.subr.mxu0 0.0
        %1687 = vmatpush1.msra.mxu0 0.0
        %1688 = vmatprep.subr.mxu0 0.0
        %1689 = vmatpush1.msra.mxu0 0.0
        %1690 = vmatprep.subr.mxu0 0.0
        %1691 = vmatpush1.msra.mxu0 0.0
        %1692 = vmatprep.subr.mxu0 0.0
        %1693 = vmatpush1.msra.mxu0 0.0
        %1694 = vmatprep.subr.mxu0 0.0
        %1695 = vmatpush1.msra.mxu0 0.0
        %1696 = vmatprep.subr.mxu0 0.0
        %1697 = vmatpush1.msra.mxu0 0.0
        %1698 = vmatprep.mubr.f32.mxu0 0.0
        %1699 = vmatmul.mubr.f32.gmra.mrb[0].mxu0 %v1632
        %v1700 = vpop.f32.mrb[0].mxu0
        %v1701 = vadd.f32 %v1629, %v1700
        %v1702 = vpop.f32.mrb[0].mxu0
        %1703 = vdwg.mxu0
        %v1704 = vld [vmem:[#allocation2] sm:$0x1]
        %v1706 = vlaneseq
        %v1707 = vshrl.u32 %v1706, 7
        %v1708 = vsub.s32 0, %v1707
        %v1709 = vrot.slane %v1704, %v1708
        %1710 = vset.pattern.permute.xlu0 0
        %1711 = vperm.xlu0 %1710, %v1709
        %v1712 = vpop.permute.xlu0 %1711
        %v1714 = vmul.f32 %v1712, %v1701
        %v1715 = vxor.u32 %v1714, 2147483648
        %v1716 = vmul.f32 %v1715, 1.442695
        %v1717 = vpow.pop %v1716
        %v1718 = vadd.f32 %v1717, 1.0
        %v1719 = vrcp.pop %v1718
        %v1720 = vmul.f32 1.0, %v1719
        %v1721 = vmul.f32 %v1701, %v1720
        %1723 = vrot.lane.b32.xlu0 %v1701, 96
        %v1724 = vpop.permute.xlu0 %1723
        %v1726 = vmul.f32 %v1721, %v1724
        %v1727 = vadd.f32 %v1535, %v1726
        %v1728 = vld [vmem:[%s13] sm:$0xff]
        %v1729 = vld [vmem:[%s13 + $0x8] sm:$0xff]
        %v1730 = vld [vmem:[%s13 + $0x10] sm:$0xff]
        %v1731 = vld [vmem:[%s13 + $0x18] sm:$0xff]
        %v1732 = vld [vmem:[%s14] sm:$0x1]
        %v1734 = vlaneseq
        %v1735 = vshrl.u32 %v1734, 7
        %v1736 = vsub.s32 0, %v1735
        %v1737 = vrot.slane %v1732, %v1736
        %v1740 = vsel %vm553, %v1727, 0
        %1742 = vmatprep.subr.mxu0 0.0
        %1743 = vmatpush1.msra.mxu0 %v1728
        %1744 = vmatprep.subr.mxu0 0.0
        %1745 = vmatpush1.msra.mxu0 %v1729
        %1746 = vmatprep.subr.mxu0 0.0
        %1747 = vmatpush1.msra.mxu0 %v1730
        %1748 = vmatprep.subr.mxu0 0.0
        %1749 = vmatpush1.msra.mxu0 %v1731
        %1750 = vmatprep.subr.mxu0 0.0
        %1751 = vmatpush1.msra.mxu0 0.0
        %1752 = vmatprep.subr.mxu0 0.0
        %1753 = vmatpush1.msra.mxu0 0.0
        %1754 = vmatprep.subr.mxu0 0.0
        %1755 = vmatpush1.msra.mxu0 0.0
        %1756 = vmatprep.subr.mxu0 0.0
        %1757 = vmatpush1.msra.mxu0 0.0
        %1758 = vmatprep.subr.mxu0 0.0
        %1759 = vmatpush1.msra.mxu0 0.0
        %1760 = vmatprep.subr.mxu0 0.0
        %1761 = vmatpush1.msra.mxu0 0.0
        %1762 = vmatprep.subr.mxu0 0.0
        %1763 = vmatpush1.msra.mxu0 0.0
        %1764 = vmatprep.subr.mxu0 0.0
        %1765 = vmatpush1.msra.mxu0 0.0
        %1766 = vmatprep.subr.mxu0 0.0
        %1767 = vmatpush1.msra.mxu0 0.0
        %1768 = vmatprep.subr.mxu0 0.0
        %1769 = vmatpush1.msra.mxu0 0.0
        %1770 = vmatprep.subr.mxu0 0.0
        %1771 = vmatpush1.msra.mxu0 0.0
        %1772 = vmatprep.subr.mxu0 0.0
        %1773 = vmatpush1.msra.mxu0 0.0
        %1774 = vmatprep.subr.mxu0 0.0
        %1775 = vmatpush1.msra.mxu0 0.0
        %1776 = vmatprep.subr.mxu0 0.0
        %1777 = vmatpush1.msra.mxu0 0.0
        %1778 = vmatprep.subr.mxu0 0.0
        %1779 = vmatpush1.msra.mxu0 0.0
        %1780 = vmatprep.subr.mxu0 0.0
        %1781 = vmatpush1.msra.mxu0 0.0
        %1782 = vmatprep.subr.mxu0 0.0
        %1783 = vmatpush1.msra.mxu0 0.0
        %1784 = vmatprep.subr.mxu0 0.0
        %1785 = vmatpush1.msra.mxu0 0.0
        %1786 = vmatprep.subr.mxu0 0.0
        %1787 = vmatpush1.msra.mxu0 0.0
        %1788 = vmatprep.subr.mxu0 0.0
        %1789 = vmatpush1.msra.mxu0 0.0
        %1790 = vmatprep.subr.mxu0 0.0
        %1791 = vmatpush1.msra.mxu0 0.0
        %1792 = vmatprep.subr.mxu0 0.0
        %1793 = vmatpush1.msra.mxu0 0.0
        %1794 = vmatprep.subr.mxu0 0.0
        %1795 = vmatpush1.msra.mxu0 0.0
        %1796 = vmatprep.subr.mxu0 0.0
        %1797 = vmatpush1.msra.mxu0 0.0
        %1798 = vmatprep.subr.mxu0 0.0
        %1799 = vmatpush1.msra.mxu0 0.0
        %1800 = vmatprep.subr.mxu0 0.0
        %1801 = vmatpush1.msra.mxu0 0.0
        %1802 = vmatprep.subr.mxu0 0.0
        %1803 = vmatpush1.msra.mxu0 0.0
        %1804 = vmatprep.subr.mxu0 0.0
        %1805 = vmatpush1.msra.mxu0 0.0
        %1806 = vmatprep.mubr.f32.mxu0 0.0
        %1807 = vmatmul.mubr.f32.gmra.mrb[0].mxu0 %v1740
        %v1808 = vpop.f32.mrb[0].mxu0
        %v1809 = vadd.f32 %v1737, %v1808
        %v1810 = vpop.f32.mrb[0].mxu0
        %1811 = vdwg.mxu0
        %1812 = vst [vmem:[%s549] sm:$0xff] %v1809
        %s1813 = sand.u32 %s364, 1
        %s1814 = scalar_lea.sflag [#allocation5], %s1813
        %s1815 = sand.u32 %s364, 1
        %s1816 = smul.addr %s1815, 8
        %s1817 = scalar_lea.vmem [#allocation11], %s1816
        // Predicated region
        $region97: #{tpu_custom_call.1} parent=79 // pred_check
          %p1818 = pneg %p374
        $region98: #{tpu_custom_call.1} parent=79 // pred_check_branch
          %1820 = sbr.rel (%p1818) target = $region100
        $region99: #{tpu_custom_call.1} parent=79 // pred_region
          %s1822 = ssub.s32 128, 128
          %1823 = vsyncadd %s1814, %s1822
          %s1824 = smul.addr %s36, 128
          %s1825 = scalar_lea.hbm %s15, %s1824
          %s1827 = sshll.u32 %s1817, 4
          %s1828 = int_to_ptr.vmem [resolvable:$true] %s1827
          %1830 = dma.vmem_to_hbm [thread:$0]  %s1828, 128, %s1825, %s1814
        $region100: #{tpu_custom_call.1} parent=79 // pred_fallthru
          _
      $region80: #{tpu_custom_call.1} parent=5 // pred_fallthru
        _
      %p1831 = scmp.le.s32.totalorder 2, %s31
      // Predicated region
      $region101: #{tpu_custom_call.1} parent=5 // pred_check
        %p1832 = pneg %p1831
      $region102: #{tpu_custom_call.1} parent=5 // pred_check_branch
        %1834 = sbr.rel (%p1832) target = $region104
      $region103: #{tpu_custom_call.1} parent=5 // pred_region
        %s1835 = ssub.s32 %s31, 2
        // Predicated region
        $region105: #{tpu_custom_call.1} parent=103 // pred_check
          %p1836 = pneg %p380
        $region106: #{tpu_custom_call.1} parent=103 // pred_check_branch
          %1838 = sbr.rel (%p1836) target = $region108
        $region107: #{tpu_custom_call.1} parent=103 // pred_region
          %s1839 = sand.u32 %s365, 1
          %s1840 = scalar_lea.sflag [#allocation5], %s1839
          %s1841 = sand.u32 %s365, 1
          %s1842 = smul.addr %s1841, 8
          %s1843 = scalar_lea.vmem [#allocation11], %s1842
          %1844 = dma.done %s1840, 128
        $region108: #{tpu_custom_call.1} parent=103 // pred_fallthru
          _
      $region104: #{tpu_custom_call.1} parent=5 // pred_fallthru
        _
    $region6: #{tpu_custom_call.1} parent=1 // loop_footer
      %s35 = sadd.s32 1, %s31
    $region7: #{tpu_custom_call.1} parent=1 // loop_footer_branch
      %30 = sbr.rel target = $region3
    $region8: #{tpu_custom_call.1} parent=1 // loop_exit
      _
    %1845 = vsyncpa [#allocation4], 1
    %s1846 = scalar_lea.sflag [#allocation4], 1
    %1847 = vsyncpa %s1846, 1
    %1848 = vsyncpa [#allocation7], 1
    %1849 = vsyncpa [#allocation10], 1
    %1850 = vsyncpa [#allocation5], 1
    %s1851 = scalar_lea.sflag [#allocation5], 1
    %1852 = vsyncpa %s1851, 1

</llo_original>
